<compile_context>
chip_gen: v7x
topology: tpu7x:2x2x1
jax: 0.10.0
libtpu: 0.0.40
codegen_flags: <defaults>
</compile_context>

<pallas_src>
import functools

import jax
import jax.numpy as jnp
from jax.experimental import pallas as pl
from jax.experimental.pallas import tpu as pltpu

# ---------------------------------------------------------------------------
# Hyper-params (match the PyTorch globals at small, TPU-friendly sizes)
# ---------------------------------------------------------------------------
N_EMBED = 32            # n_embed
N_HEAD = 4              # n_head
HEAD_SIZE = N_EMBED // N_HEAD
BLOCK_SIZE = 8          # max sequence length (tril buffer size)
DROPOUT = 0.0           # TODO(synk): eval-mode only; train-mode dropout would need
                        # pltpu.prng_seed/prng_random_bits masking in-kernel.
LN_EPS = 1e-5
SCALE = float(N_EMBED) ** -0.5   # reference scales by n_embed (C), not head_size

# Sequences per grid step (rows per block = SEQS_PER_BLOCK * T).  512 seqs of
# T=8, C=32: I/O blocks + double buffering + the f32 (rows, 4C) FFN hidden stay
# far under the scoped-VMEM default on all generations while M = 4096.
SEQS_PER_BLOCK = 512


def _layernorm(h, gamma, beta):
    mu = jnp.mean(h, axis=-1, keepdims=True)
    var = jnp.mean((h - mu) ** 2, axis=-1, keepdims=True)
    return (h - mu) * jax.lax.rsqrt(var + LN_EPS) * gamma + beta


def block_kernel(x_ref,
                 ln1_g_ref, ln1_b_ref,
                 wqkv_ref, wp_ref, bp_ref,
                 ln2_g_ref, ln2_b_ref,
                 w1_ref, b1_ref, w2_ref, b2_ref,
                 o_ref, *, seq_len):
    # x block: (rows, C), rows = n_seq * seq_len (batch*time flattened).
    x = x_ref[...].astype(jnp.float32)
    rows, C = x.shape
    n_seq = rows // seq_len

    # ---------------- LayerNorm 1 (f32) ----------------
    h = _layernorm(x, ln1_g_ref[...], ln1_b_ref[...])

    # ---------------- fused QKV projection (bf16 MXU operands, f32 accum) ----
    qkv = jnp.dot(h.astype(jnp.bfloat16), wqkv_ref[...],
                  preferred_element_type=jnp.float32)              # (rows, 3C)
    qkv3 = qkv.reshape(n_seq, seq_len, 3 * C)                      # (B_blk, T, 3C)

    # Causal mask, shared by every head / sequence (hoisted out of head loop).
    r_i = jax.lax.broadcasted_iota(jnp.int32, (seq_len, seq_len), 0)
    c_i = jax.lax.broadcasted_iota(jnp.int32, (seq_len, seq_len), 1)
    causal = (r_i >= c_i)[None]                                    # (1, T, T)

    head_outs = []
    for hh in range(N_HEAD):                                       # unrolled, N_HEAD=4
        s = hh * HEAD_SIZE
        qh = qkv3[:, :, 0 * C + s: 0 * C + s + HEAD_SIZE]          # (B_blk, T, D)
        kh = qkv3[:, :, 1 * C + s: 1 * C + s + HEAD_SIZE]
        vh = qkv3[:, :, 2 * C + s: 2 * C + s + HEAD_SIZE]

        # batched over all sequences in the block (single batch dim)
        wei = jnp.einsum('bqd,bkd->bqk', qh, kh,
                         preferred_element_type=jnp.float32) * SCALE
        wei = jnp.where(causal, wei, -jnp.inf)
        wei = wei - jnp.max(wei, axis=-1, keepdims=True)
        ew = jnp.exp(wei)
        p = ew * pl.reciprocal(jnp.sum(ew, axis=-1, keepdims=True), approx=True)
        # dropout(p): identity in eval mode

        head_outs.append(jnp.einsum('bqk,bkd->bqd', p, vh,
                                    preferred_element_type=jnp.float32))

    attn = jnp.concatenate(head_outs, axis=-1).reshape(rows, C)    # (rows, C)
    # dropout(attn): identity in eval mode, then output projection (with bias)
    attn = jnp.dot(attn.astype(jnp.bfloat16), wp_ref[...],
                   preferred_element_type=jnp.float32) + bp_ref[...]
    x1 = x + attn

    # ---------------- LayerNorm 2 + FeedForward ----------------
    h2 = _layernorm(x1, ln2_g_ref[...], ln2_b_ref[...])
    ff = jnp.dot(h2.astype(jnp.bfloat16), w1_ref[...],
                 preferred_element_type=jnp.float32) + b1_ref[...]
    ff = jnp.maximum(ff, 0.0)
    ff = jnp.dot(ff.astype(jnp.bfloat16), w2_ref[...],
                 preferred_element_type=jnp.float32) + b2_ref[...]
    # dropout(ff): identity in eval mode

    o_ref[...] = (x1 + ff).astype(o_ref.dtype)


def transformer_block(x, params, *, seqs_per_block=SEQS_PER_BLOCK):
    B, T, C = x.shape
    assert C == N_EMBED and T <= BLOCK_SIZE

    # Flatten (B, T, C) -> (B*T, C): all dense ops see a big M dimension and the
    # I/O DMA moves one large contiguous slab per grid step.
    x_rows = x.reshape(B * T, C)

    # Fuse QKV weights once; cast matmul weights to bf16 (f32 accumulation in-kernel).
    wqkv = jnp.concatenate([params["wq"], params["wk"], params["wv"]],
                           axis=1).astype(jnp.bfloat16)            # (C, 3C)
    wp = params["wp"].astype(jnp.bfloat16)
    w1 = params["w1"].astype(jnp.bfloat16)
    w2 = params["w2"].astype(jnp.bfloat16)

    param_list = [
        params["ln1_g"], params["ln1_b"],
        wqkv, wp, params["bp"],
        params["ln2_g"], params["ln2_b"],
        w1, params["b1"], w2, params["b2"],
    ]

    n_seq_blk = min(B, seqs_per_block)
    row_blk = n_seq_blk * T
    grid = (pl.cdiv(B, n_seq_blk),)

    def _full_spec(p):
        nd = p.ndim
        # grid-invariant param block: DMA'd into VMEM once, resident across steps
        return pl.BlockSpec(p.shape, lambda i, _nd=nd: (0,) * _nd)

    in_specs = [pl.BlockSpec((row_blk, C), lambda i: (i, 0))]
    in_specs += [_full_spec(p) for p in param_list]

    out_rows = pl.pallas_call(
        functools.partial(block_kernel, seq_len=T),
        out_shape=jax.ShapeDtypeStruct((B * T, C), x.dtype),
        grid=grid,
        in_specs=in_specs,
        out_specs=pl.BlockSpec((row_blk, C), lambda i: (i, 0)),
        compiler_params=pltpu.CompilerParams(
            dimension_semantics=("parallel",)),
    )(x_rows, *param_list)

    return out_rows.reshape(B, T, C)


def init_params(key):
    ks = jax.random.split(key, 8)
    scale = 0.02
    C = N_EMBED
    # weights stored as (in, out) so the kernel does y = x @ W + b,
    # equivalent to PyTorch's x @ weight.T + bias.
    return {
        "ln1_g": jnp.ones((1, C), jnp.float32),
        "ln1_b": jnp.zeros((1, C), jnp.float32),
        "wq": scale * jax.random.normal(ks[0], (C, C), jnp.float32),
        "wk": scale * jax.random.normal(ks[1], (C, C), jnp.float32),
        "wv": scale * jax.random.normal(ks[2], (C, C), jnp.float32),
        "wp": scale * jax.random.normal(ks[3], (C, C), jnp.float32),
        "bp": jnp.zeros((1, C), jnp.float32),
        "ln2_g": jnp.ones((1, C), jnp.float32),
        "ln2_b": jnp.zeros((1, C), jnp.float32),
        "w1": scale * jax.random.normal(ks[4], (C, 4 * C), jnp.float32),
        "b1": 0.01 * jnp.ones((1, 4 * C), jnp.float32),
        "w2": scale * jax.random.normal(ks[5], (4 * C, C), jnp.float32),
        "b2": 0.01 * jnp.ones((1, C), jnp.float32),
    }


def block_reference(x, params):
    """Pure-JAX f32 reference of the PyTorch Block forward (eval mode)."""
    B, T, C = x.shape

    def ln(h, g, b):
        mu = jnp.mean(h, axis=-1, keepdims=True)
        var = jnp.mean((h - mu) ** 2, axis=-1, keepdims=True)
        return (h - mu) * jax.lax.rsqrt(var + LN_EPS) * g + b

    h = ln(x, params["ln1_g"], params["ln1_b"])
    mask = jnp.tril(jnp.ones((T, T), bool))
    heads = []
    for hh in range(N_HEAD):
        s = hh * HEAD_SIZE
        q = h @ params["wq"][:, s:s + HEAD_SIZE]
        k = h @ params["wk"][:, s:s + HEAD_SIZE]
        v = h @ params["wv"][:, s:s + HEAD_SIZE]
        wei = jnp.einsum('bqd,bkd->bqk', q, k) * (C ** -0.5)
        wei = jnp.where(mask, wei, -jnp.inf)
        wei = jax.nn.softmax(wei, axis=-1)
        heads.append(jnp.einsum('bqk,bkd->bqd', wei, v))
    attn = jnp.concatenate(heads, axis=-1) @ params["wp"] + params["bp"]
    x = x + attn
    h2 = ln(x, params["ln2_g"], params["ln2_b"])
    ff = jnp.maximum(h2 @ params["w1"] + params["b1"], 0.0)
    ff = ff @ params["w2"] + params["b2"]
    return x + ff


if __name__ == "__main__":
    key = jax.random.PRNGKey(0)
    kx, kx2, kp = jax.random.split(key, 3)
    params = init_params(kp)

    # --- small canonical shape: batch=2, seq=8, hidden=32 (single grid step) ---
    B, T, C = 2, BLOCK_SIZE, N_EMBED
    x = jax.random.normal(kx, (B, T, C), jnp.float32)
    out = transformer_block(x, params)
    jax.block_until_ready(out)
    assert out.shape == (B, T, C)
    ref = block_reference(x, params)
    assert bool(jnp.all(jnp.isfinite(out)))
    # bf16 matmul operands + approx reciprocal -> small, bounded deviation from f32 ref
    assert bool(jnp.allclose(out, ref, rtol=2e-2, atol=2e-2)), \
        float(jnp.max(jnp.abs(out - ref)))

    # --- exercise the multi-grid-step / pipelined path (still tiny: 256x8x32) ---
    B2 = 256
    x2 = jax.random.normal(kx2, (B2, T, C), jnp.float32)
    out2 = transformer_block(x2, params, seqs_per_block=128)   # grid = (2,)
    jax.block_until_ready(out2)
    ref2 = block_reference(x2, params)
    assert bool(jnp.allclose(out2, ref2, rtol=2e-2, atol=2e-2)), \
        float(jnp.max(jnp.abs(out2 - ref2)))

    print("KERNEL_OK")
</pallas_src>

<mosaic_0001>
module attributes {stable_mosaic.version = 11 : i64} {
  func.func @block_kernel(%arg0: i32, %arg1: memref<16x32xf32, #tpu.memory_space<vmem>>, %arg2: memref<1x32xf32, #tpu.memory_space<vmem>>, %arg3: memref<1x32xf32, #tpu.memory_space<vmem>>, %arg4: memref<32x96xbf16, #tpu.memory_space<vmem>>, %arg5: memref<32x32xbf16, #tpu.memory_space<vmem>>, %arg6: memref<1x32xf32, #tpu.memory_space<vmem>>, %arg7: memref<1x32xf32, #tpu.memory_space<vmem>>, %arg8: memref<1x32xf32, #tpu.memory_space<vmem>>, %arg9: memref<32x128xbf16, #tpu.memory_space<vmem>>, %arg10: memref<1x128xf32, #tpu.memory_space<vmem>>, %arg11: memref<128x32xbf16, #tpu.memory_space<vmem>>, %arg12: memref<1x32xf32, #tpu.memory_space<vmem>>, %arg13: memref<16x32xf32, #tpu.memory_space<vmem>>) attributes {dimension_semantics = [#tpu.dimension_semantics<parallel>], iteration_bounds = array<i64: 1>, scalar_prefetch = 0 : i64, scratch_operands = 0 : i64, tpu.core_type = #tpu.core_type<tc>, window_params = [{transform_indices = @transform_0, window_bounds = array<i64: 16, 32>}, {pipeline_mode = #tpu.pipeline_mode<synchronous>, transform_indices = @transform_1, window_bounds = array<i64: 1, 32>}, {pipeline_mode = #tpu.pipeline_mode<synchronous>, transform_indices = @transform_2, window_bounds = array<i64: 1, 32>}, {pipeline_mode = #tpu.pipeline_mode<synchronous>, transform_indices = @transform_3, window_bounds = array<i64: 32, 96>}, {pipeline_mode = #tpu.pipeline_mode<synchronous>, transform_indices = @transform_4, window_bounds = array<i64: 32, 32>}, {pipeline_mode = #tpu.pipeline_mode<synchronous>, transform_indices = @transform_5, window_bounds = array<i64: 1, 32>}, {pipeline_mode = #tpu.pipeline_mode<synchronous>, transform_indices = @transform_6, window_bounds = array<i64: 1, 32>}, {pipeline_mode = #tpu.pipeline_mode<synchronous>, transform_indices = @transform_7, window_bounds = array<i64: 1, 32>}, {pipeline_mode = #tpu.pipeline_mode<synchronous>, transform_indices = @transform_8, window_bounds = array<i64: 32, 128>}, {pipeline_mode = #tpu.pipeline_mode<synchronous>, transform_indices = @transform_9, window_bounds = array<i64: 1, 128>}, {pipeline_mode = #tpu.pipeline_mode<synchronous>, transform_indices = @transform_10, window_bounds = array<i64: 128, 32>}, {pipeline_mode = #tpu.pipeline_mode<synchronous>, transform_indices = @transform_11, window_bounds = array<i64: 1, 32>}, {transform_indices = @transform_12, window_bounds = array<i64: 16, 32>}]} {
    %c0 = arith.constant 0 : index
    %c0_0 = arith.constant 0 : index
    %0 = vector.load %arg1[%c0, %c0_0] : memref<16x32xf32, #tpu.memory_space<vmem>>, vector<16x32xf32>
    %c0_1 = arith.constant 0 : index
    %c0_2 = arith.constant 0 : index
    %1 = vector.load %arg2[%c0_1, %c0_2] : memref<1x32xf32, #tpu.memory_space<vmem>>, vector<1x32xf32>
    %c0_3 = arith.constant 0 : index
    %c0_4 = arith.constant 0 : index
    %2 = vector.load %arg3[%c0_3, %c0_4] : memref<1x32xf32, #tpu.memory_space<vmem>>, vector<1x32xf32>
    %cst = arith.constant dense<0.000000e+00> : vector<16xf32>
    %3 = vector.multi_reduction <add>, %0, %cst [1] : vector<16x32xf32> to vector<16xf32>
    %4 = vector.shape_cast %3 : vector<16xf32> to vector<16x1xf32>
    %cst_5 = arith.constant 3.200000e+01 : f32
    %5 = vector.broadcast %cst_5 : f32 to vector<16x1xf32>
    %6 = arith.divf %4, %5 : vector<16x1xf32>
    %7 = vector.broadcast %6 : vector<16x1xf32> to vector<16x32xf32>
    %8 = arith.subf %0, %7 : vector<16x32xf32>
    %9 = arith.mulf %8, %8 : vector<16x32xf32>
    %cst_6 = arith.constant dense<0.000000e+00> : vector<16xf32>
    %10 = vector.multi_reduction <add>, %9, %cst_6 [1] : vector<16x32xf32> to vector<16xf32>
    %11 = vector.shape_cast %10 : vector<16xf32> to vector<16x1xf32>
    %cst_7 = arith.constant 3.200000e+01 : f32
    %12 = vector.broadcast %cst_7 : f32 to vector<16x1xf32>
    %13 = arith.divf %11, %12 : vector<16x1xf32>
    %14 = vector.broadcast %6 : vector<16x1xf32> to vector<16x32xf32>
    %15 = arith.subf %0, %14 : vector<16x32xf32>
    %cst_8 = arith.constant 9.99999974E-6 : f32
    %16 = vector.broadcast %cst_8 : f32 to vector<16x1xf32>
    %17 = arith.addf %13, %16 : vector<16x1xf32>
    %18 = math.rsqrt %17 : vector<16x1xf32>
    %19 = vector.broadcast %18 : vector<16x1xf32> to vector<16x32xf32>
    %20 = arith.mulf %15, %19 : vector<16x32xf32>
    %21 = vector.broadcast %1 : vector<1x32xf32> to vector<16x32xf32>
    %22 = arith.mulf %20, %21 : vector<16x32xf32>
    %23 = vector.broadcast %2 : vector<1x32xf32> to vector<16x32xf32>
    %24 = arith.addf %22, %23 : vector<16x32xf32>
    %25 = arith.truncf %24 : vector<16x32xf32> to vector<16x32xbf16>
    %c0_9 = arith.constant 0 : index
    %c0_10 = arith.constant 0 : index
    %26 = vector.load %arg4[%c0_9, %c0_10] : memref<32x96xbf16, #tpu.memory_space<vmem>>, vector<32x96xbf16>
    %cst_11 = arith.constant dense<0.000000e+00> : vector<16x96xf32>
    %27 = tpu.matmul %25, %26, %cst_11 {dimension_numbers = #tpu.dot_dimension_numbers<[1], [0], [0], [1], [0, 0, 1, 1], [], []>} : vector<16x32xbf16>, vector<32x96xbf16>, vector<16x96xf32> -> vector<16x96xf32>
    %28 = vector.shape_cast %27 : vector<16x96xf32> to vector<2x8x96xf32>
    %29 = tpu.iota {dimensions = array<i32: 0>} : vector<8x8xi32>
    %30 = tpu.iota {dimensions = array<i32: 1>} : vector<8x8xi32>
    %31 = arith.cmpi sge, %29, %30 : vector<8x8xi32>
    %32 = vector.shape_cast %31 : vector<8x8xi1> to vector<1x8x8xi1>
    %33 = vector.extract_strided_slice %28 {offsets = [0, 0, 0], sizes = [2, 8, 8], strides = [1, 1, 1]} : vector<2x8x96xf32> to vector<2x8x8xf32>
    %34 = vector.extract_strided_slice %28 {offsets = [0, 0, 32], sizes = [2, 8, 8], strides = [1, 1, 1]} : vector<2x8x96xf32> to vector<2x8x8xf32>
    %35 = vector.extract_strided_slice %28 {offsets = [0, 0, 64], sizes = [2, 8, 8], strides = [1, 1, 1]} : vector<2x8x96xf32> to vector<2x8x8xf32>
    "tpu.trace_start"() <{level = 10 : i32, message = "bqd,bkd->bqk"}> : () -> ()
    %cst_12 = arith.constant dense<0.000000e+00> : vector<2x8x8xf32>
    %36 = tpu.matmul %33, %34, %cst_12 {dimension_numbers = #tpu.dot_dimension_numbers<[2], [2], [1], [1], [0, 0, 0, 1, 1, 1], [0], [0]>} : vector<2x8x8xf32>, vector<2x8x8xf32>, vector<2x8x8xf32> -> vector<2x8x8xf32>
    "tpu.trace_stop"() : () -> ()
    %cst_13 = arith.constant 0.176776692 : f32
    %37 = vector.broadcast %cst_13 : f32 to vector<2x8x8xf32>
    %38 = arith.mulf %36, %37 : vector<2x8x8xf32>
    %cst_14 = arith.constant 0xFF800000 : f32
    %39 = vector.shape_cast %32 : vector<1x8x8xi1> to vector<1x8x8xi1>
    %40 = vector.broadcast %39 : vector<1x8x8xi1> to vector<2x8x8xi1>
    %41 = vector.broadcast %cst_14 : f32 to vector<2x8x8xf32>
    %42 = arith.select %40, %38, %41 : vector<2x8x8xi1>, vector<2x8x8xf32>
    %cst_15 = arith.constant dense<0xFF800000> : vector<2x8xf32>
    %43 = vector.multi_reduction <maximumf>, %42, %cst_15 [2] : vector<2x8x8xf32> to vector<2x8xf32>
    %44 = vector.shape_cast %43 : vector<2x8xf32> to vector<2x8x1xf32>
    %45 = vector.broadcast %44 : vector<2x8x1xf32> to vector<2x8x8xf32>
    %46 = arith.subf %42, %45 : vector<2x8x8xf32>
    %47 = math.exp %46 : vector<2x8x8xf32>
    %cst_16 = arith.constant dense<0.000000e+00> : vector<2x8xf32>
    %48 = vector.multi_reduction <add>, %47, %cst_16 [2] : vector<2x8x8xf32> to vector<2x8xf32>
    %49 = vector.shape_cast %48 : vector<2x8xf32> to vector<2x8x1xf32>
    %50 = tpu.reciprocal %49 {approx = true} : vector<2x8x1xf32> -> vector<2x8x1xf32>
    %51 = vector.broadcast %50 : vector<2x8x1xf32> to vector<2x8x8xf32>
    %52 = arith.mulf %47, %51 : vector<2x8x8xf32>
    "tpu.trace_start"() <{level = 10 : i32, message = "bqk,bkd->bqd"}> : () -> ()
    %cst_17 = arith.constant dense<0.000000e+00> : vector<2x8x8xf32>
    %53 = tpu.matmul %52, %35, %cst_17 {dimension_numbers = #tpu.dot_dimension_numbers<[2], [1], [1], [2], [0, 0, 0, 1, 1, 2], [0], [0]>} : vector<2x8x8xf32>, vector<2x8x8xf32>, vector<2x8x8xf32> -> vector<2x8x8xf32>
    "tpu.trace_stop"() : () -> ()
    %54 = vector.extract_strided_slice %28 {offsets = [0, 0, 8], sizes = [2, 8, 8], strides = [1, 1, 1]} : vector<2x8x96xf32> to vector<2x8x8xf32>
    %55 = vector.extract_strided_slice %28 {offsets = [0, 0, 40], sizes = [2, 8, 8], strides = [1, 1, 1]} : vector<2x8x96xf32> to vector<2x8x8xf32>
    %56 = vector.extract_strided_slice %28 {offsets = [0, 0, 72], sizes = [2, 8, 8], strides = [1, 1, 1]} : vector<2x8x96xf32> to vector<2x8x8xf32>
    "tpu.trace_start"() <{level = 10 : i32, message = "bqd,bkd->bqk"}> : () -> ()
    %cst_18 = arith.constant dense<0.000000e+00> : vector<2x8x8xf32>
    %57 = tpu.matmul %54, %55, %cst_18 {dimension_numbers = #tpu.dot_dimension_numbers<[2], [2], [1], [1], [0, 0, 0, 1, 1, 1], [0], [0]>} : vector<2x8x8xf32>, vector<2x8x8xf32>, vector<2x8x8xf32> -> vector<2x8x8xf32>
    "tpu.trace_stop"() : () -> ()
    %cst_19 = arith.constant 0.176776692 : f32
    %58 = vector.broadcast %cst_19 : f32 to vector<2x8x8xf32>
    %59 = arith.mulf %57, %58 : vector<2x8x8xf32>
    %cst_20 = arith.constant 0xFF800000 : f32
    %60 = vector.shape_cast %32 : vector<1x8x8xi1> to vector<1x8x8xi1>
    %61 = vector.broadcast %60 : vector<1x8x8xi1> to vector<2x8x8xi1>
    %62 = vector.broadcast %cst_20 : f32 to vector<2x8x8xf32>
    %63 = arith.select %61, %59, %62 : vector<2x8x8xi1>, vector<2x8x8xf32>
    %cst_21 = arith.constant dense<0xFF800000> : vector<2x8xf32>
    %64 = vector.multi_reduction <maximumf>, %63, %cst_21 [2] : vector<2x8x8xf32> to vector<2x8xf32>
    %65 = vector.shape_cast %64 : vector<2x8xf32> to vector<2x8x1xf32>
    %66 = vector.broadcast %65 : vector<2x8x1xf32> to vector<2x8x8xf32>
    %67 = arith.subf %63, %66 : vector<2x8x8xf32>
    %68 = math.exp %67 : vector<2x8x8xf32>
    %cst_22 = arith.constant dense<0.000000e+00> : vector<2x8xf32>
    %69 = vector.multi_reduction <add>, %68, %cst_22 [2] : vector<2x8x8xf32> to vector<2x8xf32>
    %70 = vector.shape_cast %69 : vector<2x8xf32> to vector<2x8x1xf32>
    %71 = tpu.reciprocal %70 {approx = true} : vector<2x8x1xf32> -> vector<2x8x1xf32>
    %72 = vector.broadcast %71 : vector<2x8x1xf32> to vector<2x8x8xf32>
    %73 = arith.mulf %68, %72 : vector<2x8x8xf32>
    "tpu.trace_start"() <{level = 10 : i32, message = "bqk,bkd->bqd"}> : () -> ()
    %cst_23 = arith.constant dense<0.000000e+00> : vector<2x8x8xf32>
    %74 = tpu.matmul %73, %56, %cst_23 {dimension_numbers = #tpu.dot_dimension_numbers<[2], [1], [1], [2], [0, 0, 0, 1, 1, 2], [0], [0]>} : vector<2x8x8xf32>, vector<2x8x8xf32>, vector<2x8x8xf32> -> vector<2x8x8xf32>
    "tpu.trace_stop"() : () -> ()
    %75 = vector.extract_strided_slice %28 {offsets = [0, 0, 16], sizes = [2, 8, 8], strides = [1, 1, 1]} : vector<2x8x96xf32> to vector<2x8x8xf32>
    %76 = vector.extract_strided_slice %28 {offsets = [0, 0, 48], sizes = [2, 8, 8], strides = [1, 1, 1]} : vector<2x8x96xf32> to vector<2x8x8xf32>
    %77 = vector.extract_strided_slice %28 {offsets = [0, 0, 80], sizes = [2, 8, 8], strides = [1, 1, 1]} : vector<2x8x96xf32> to vector<2x8x8xf32>
    "tpu.trace_start"() <{level = 10 : i32, message = "bqd,bkd->bqk"}> : () -> ()
    %cst_24 = arith.constant dense<0.000000e+00> : vector<2x8x8xf32>
    %78 = tpu.matmul %75, %76, %cst_24 {dimension_numbers = #tpu.dot_dimension_numbers<[2], [2], [1], [1], [0, 0, 0, 1, 1, 1], [0], [0]>} : vector<2x8x8xf32>, vector<2x8x8xf32>, vector<2x8x8xf32> -> vector<2x8x8xf32>
    "tpu.trace_stop"() : () -> ()
    %cst_25 = arith.constant 0.176776692 : f32
    %79 = vector.broadcast %cst_25 : f32 to vector<2x8x8xf32>
    %80 = arith.mulf %78, %79 : vector<2x8x8xf32>
    %cst_26 = arith.constant 0xFF800000 : f32
    %81 = vector.shape_cast %32 : vector<1x8x8xi1> to vector<1x8x8xi1>
    %82 = vector.broadcast %81 : vector<1x8x8xi1> to vector<2x8x8xi1>
    %83 = vector.broadcast %cst_26 : f32 to vector<2x8x8xf32>
    %84 = arith.select %82, %80, %83 : vector<2x8x8xi1>, vector<2x8x8xf32>
    %cst_27 = arith.constant dense<0xFF800000> : vector<2x8xf32>
    %85 = vector.multi_reduction <maximumf>, %84, %cst_27 [2] : vector<2x8x8xf32> to vector<2x8xf32>
    %86 = vector.shape_cast %85 : vector<2x8xf32> to vector<2x8x1xf32>
    %87 = vector.broadcast %86 : vector<2x8x1xf32> to vector<2x8x8xf32>
    %88 = arith.subf %84, %87 : vector<2x8x8xf32>
    %89 = math.exp %88 : vector<2x8x8xf32>
    %cst_28 = arith.constant dense<0.000000e+00> : vector<2x8xf32>
    %90 = vector.multi_reduction <add>, %89, %cst_28 [2] : vector<2x8x8xf32> to vector<2x8xf32>
    %91 = vector.shape_cast %90 : vector<2x8xf32> to vector<2x8x1xf32>
    %92 = tpu.reciprocal %91 {approx = true} : vector<2x8x1xf32> -> vector<2x8x1xf32>
    %93 = vector.broadcast %92 : vector<2x8x1xf32> to vector<2x8x8xf32>
    %94 = arith.mulf %89, %93 : vector<2x8x8xf32>
    "tpu.trace_start"() <{level = 10 : i32, message = "bqk,bkd->bqd"}> : () -> ()
    %cst_29 = arith.constant dense<0.000000e+00> : vector<2x8x8xf32>
    %95 = tpu.matmul %94, %77, %cst_29 {dimension_numbers = #tpu.dot_dimension_numbers<[2], [1], [1], [2], [0, 0, 0, 1, 1, 2], [0], [0]>} : vector<2x8x8xf32>, vector<2x8x8xf32>, vector<2x8x8xf32> -> vector<2x8x8xf32>
    "tpu.trace_stop"() : () -> ()
    %96 = vector.extract_strided_slice %28 {offsets = [0, 0, 24], sizes = [2, 8, 8], strides = [1, 1, 1]} : vector<2x8x96xf32> to vector<2x8x8xf32>
    %97 = vector.extract_strided_slice %28 {offsets = [0, 0, 56], sizes = [2, 8, 8], strides = [1, 1, 1]} : vector<2x8x96xf32> to vector<2x8x8xf32>
    %98 = vector.extract_strided_slice %28 {offsets = [0, 0, 88], sizes = [2, 8, 8], strides = [1, 1, 1]} : vector<2x8x96xf32> to vector<2x8x8xf32>
    "tpu.trace_start"() <{level = 10 : i32, message = "bqd,bkd->bqk"}> : () -> ()
    %cst_30 = arith.constant dense<0.000000e+00> : vector<2x8x8xf32>
    %99 = tpu.matmul %96, %97, %cst_30 {dimension_numbers = #tpu.dot_dimension_numbers<[2], [2], [1], [1], [0, 0, 0, 1, 1, 1], [0], [0]>} : vector<2x8x8xf32>, vector<2x8x8xf32>, vector<2x8x8xf32> -> vector<2x8x8xf32>
    "tpu.trace_stop"() : () -> ()
    %cst_31 = arith.constant 0.176776692 : f32
    %100 = vector.broadcast %cst_31 : f32 to vector<2x8x8xf32>
    %101 = arith.mulf %99, %100 : vector<2x8x8xf32>
    %cst_32 = arith.constant 0xFF800000 : f32
    %102 = vector.shape_cast %32 : vector<1x8x8xi1> to vector<1x8x8xi1>
    %103 = vector.broadcast %102 : vector<1x8x8xi1> to vector<2x8x8xi1>
    %104 = vector.broadcast %cst_32 : f32 to vector<2x8x8xf32>
    %105 = arith.select %103, %101, %104 : vector<2x8x8xi1>, vector<2x8x8xf32>
    %cst_33 = arith.constant dense<0xFF800000> : vector<2x8xf32>
    %106 = vector.multi_reduction <maximumf>, %105, %cst_33 [2] : vector<2x8x8xf32> to vector<2x8xf32>
    %107 = vector.shape_cast %106 : vector<2x8xf32> to vector<2x8x1xf32>
    %108 = vector.broadcast %107 : vector<2x8x1xf32> to vector<2x8x8xf32>
    %109 = arith.subf %105, %108 : vector<2x8x8xf32>
    %110 = math.exp %109 : vector<2x8x8xf32>
    %cst_34 = arith.constant dense<0.000000e+00> : vector<2x8xf32>
    %111 = vector.multi_reduction <add>, %110, %cst_34 [2] : vector<2x8x8xf32> to vector<2x8xf32>
    %112 = vector.shape_cast %111 : vector<2x8xf32> to vector<2x8x1xf32>
    %113 = tpu.reciprocal %112 {approx = true} : vector<2x8x1xf32> -> vector<2x8x1xf32>
    %114 = vector.broadcast %113 : vector<2x8x1xf32> to vector<2x8x8xf32>
    %115 = arith.mulf %110, %114 : vector<2x8x8xf32>
    "tpu.trace_start"() <{level = 10 : i32, message = "bqk,bkd->bqd"}> : () -> ()
    %cst_35 = arith.constant dense<0.000000e+00> : vector<2x8x8xf32>
    %116 = tpu.matmul %115, %98, %cst_35 {dimension_numbers = #tpu.dot_dimension_numbers<[2], [1], [1], [2], [0, 0, 0, 1, 1, 2], [0], [0]>} : vector<2x8x8xf32>, vector<2x8x8xf32>, vector<2x8x8xf32> -> vector<2x8x8xf32>
    "tpu.trace_stop"() : () -> ()
    %117 = tpu.concatenate %53, %74, %95, %116 in 2 : vector<2x8x8xf32>, vector<2x8x8xf32>, vector<2x8x8xf32>, vector<2x8x8xf32> -> vector<2x8x32xf32>
    %118 = vector.shape_cast %117 : vector<2x8x32xf32> to vector<16x32xf32>
    %119 = arith.truncf %118 : vector<16x32xf32> to vector<16x32xbf16>
    %c0_36 = arith.constant 0 : index
    %c0_37 = arith.constant 0 : index
    %120 = vector.load %arg5[%c0_36, %c0_37] : memref<32x32xbf16, #tpu.memory_space<vmem>>, vector<32x32xbf16>
    %cst_38 = arith.constant dense<0.000000e+00> : vector<16x32xf32>
    %121 = tpu.matmul %119, %120, %cst_38 {dimension_numbers = #tpu.dot_dimension_numbers<[1], [0], [0], [1], [0, 0, 1, 1], [], []>} : vector<16x32xbf16>, vector<32x32xbf16>, vector<16x32xf32> -> vector<16x32xf32>
    %c0_39 = arith.constant 0 : index
    %c0_40 = arith.constant 0 : index
    %122 = vector.load %arg6[%c0_39, %c0_40] : memref<1x32xf32, #tpu.memory_space<vmem>>, vector<1x32xf32>
    %123 = vector.broadcast %122 : vector<1x32xf32> to vector<16x32xf32>
    %124 = arith.addf %121, %123 : vector<16x32xf32>
    %125 = arith.addf %0, %124 : vector<16x32xf32>
    %c0_41 = arith.constant 0 : index
    %c0_42 = arith.constant 0 : index
    %126 = vector.load %arg7[%c0_41, %c0_42] : memref<1x32xf32, #tpu.memory_space<vmem>>, vector<1x32xf32>
    %c0_43 = arith.constant 0 : index
    %c0_44 = arith.constant 0 : index
    %127 = vector.load %arg8[%c0_43, %c0_44] : memref<1x32xf32, #tpu.memory_space<vmem>>, vector<1x32xf32>
    %cst_45 = arith.constant dense<0.000000e+00> : vector<16xf32>
    %128 = vector.multi_reduction <add>, %125, %cst_45 [1] : vector<16x32xf32> to vector<16xf32>
    %129 = vector.shape_cast %128 : vector<16xf32> to vector<16x1xf32>
    %cst_46 = arith.constant 3.200000e+01 : f32
    %130 = vector.broadcast %cst_46 : f32 to vector<16x1xf32>
    %131 = arith.divf %129, %130 : vector<16x1xf32>
    %132 = vector.broadcast %131 : vector<16x1xf32> to vector<16x32xf32>
    %133 = arith.subf %125, %132 : vector<16x32xf32>
    %134 = arith.mulf %133, %133 : vector<16x32xf32>
    %cst_47 = arith.constant dense<0.000000e+00> : vector<16xf32>
    %135 = vector.multi_reduction <add>, %134, %cst_47 [1] : vector<16x32xf32> to vector<16xf32>
    %136 = vector.shape_cast %135 : vector<16xf32> to vector<16x1xf32>
    %cst_48 = arith.constant 3.200000e+01 : f32
    %137 = vector.broadcast %cst_48 : f32 to vector<16x1xf32>
    %138 = arith.divf %136, %137 : vector<16x1xf32>
    %139 = vector.broadcast %131 : vector<16x1xf32> to vector<16x32xf32>
    %140 = arith.subf %125, %139 : vector<16x32xf32>
    %cst_49 = arith.constant 9.99999974E-6 : f32
    %141 = vector.broadcast %cst_49 : f32 to vector<16x1xf32>
    %142 = arith.addf %138, %141 : vector<16x1xf32>
    %143 = math.rsqrt %142 : vector<16x1xf32>
    %144 = vector.broadcast %143 : vector<16x1xf32> to vector<16x32xf32>
    %145 = arith.mulf %140, %144 : vector<16x32xf32>
    %146 = vector.broadcast %126 : vector<1x32xf32> to vector<16x32xf32>
    %147 = arith.mulf %145, %146 : vector<16x32xf32>
    %148 = vector.broadcast %127 : vector<1x32xf32> to vector<16x32xf32>
    %149 = arith.addf %147, %148 : vector<16x32xf32>
    %150 = arith.truncf %149 : vector<16x32xf32> to vector<16x32xbf16>
    %c0_50 = arith.constant 0 : index
    %c0_51 = arith.constant 0 : index
    %151 = vector.load %arg9[%c0_50, %c0_51] : memref<32x128xbf16, #tpu.memory_space<vmem>>, vector<32x128xbf16>
    %cst_52 = arith.constant dense<0.000000e+00> : vector<16x128xf32>
    %152 = tpu.matmul %150, %151, %cst_52 {dimension_numbers = #tpu.dot_dimension_numbers<[1], [0], [0], [1], [0, 0, 1, 1], [], []>} : vector<16x32xbf16>, vector<32x128xbf16>, vector<16x128xf32> -> vector<16x128xf32>
    %c0_53 = arith.constant 0 : index
    %c0_54 = arith.constant 0 : index
    %153 = vector.load %arg10[%c0_53, %c0_54] : memref<1x128xf32, #tpu.memory_space<vmem>>, vector<1x128xf32>
    %154 = vector.broadcast %153 : vector<1x128xf32> to vector<16x128xf32>
    %155 = arith.addf %152, %154 : vector<16x128xf32>
    %cst_55 = arith.constant 0.000000e+00 : f32
    %156 = vector.broadcast %cst_55 : f32 to vector<16x128xf32>
    %157 = arith.maximumf %155, %156 : vector<16x128xf32>
    %158 = arith.truncf %157 : vector<16x128xf32> to vector<16x128xbf16>
    %c0_56 = arith.constant 0 : index
    %c0_57 = arith.constant 0 : index
    %159 = vector.load %arg11[%c0_56, %c0_57] : memref<128x32xbf16, #tpu.memory_space<vmem>>, vector<128x32xbf16>
    %cst_58 = arith.constant dense<0.000000e+00> : vector<16x32xf32>
    %160 = tpu.matmul %158, %159, %cst_58 {dimension_numbers = #tpu.dot_dimension_numbers<[1], [0], [0], [1], [0, 0, 1, 1], [], []>} : vector<16x128xbf16>, vector<128x32xbf16>, vector<16x32xf32> -> vector<16x32xf32>
    %c0_59 = arith.constant 0 : index
    %c0_60 = arith.constant 0 : index
    %161 = vector.load %arg12[%c0_59, %c0_60] : memref<1x32xf32, #tpu.memory_space<vmem>>, vector<1x32xf32>
    %162 = vector.broadcast %161 : vector<1x32xf32> to vector<16x32xf32>
    %163 = arith.addf %160, %162 : vector<16x32xf32>
    %164 = arith.addf %125, %163 : vector<16x32xf32>
    %c0_61 = arith.constant 0 : index
    %c0_62 = arith.constant 0 : index
    %165 = vector.load %arg13[%c0_61, %c0_62] : memref<16x32xf32, #tpu.memory_space<vmem>>, vector<16x32xf32>
    tpu.vector_store %arg13[%c0_61, %c0_62], %164 {strides = array<i32>} : memref<16x32xf32, #tpu.memory_space<vmem>>, vector<16x32xf32>,
    return
  }
  func.func @transform_0(%arg0: i32) -> (i32, i32) {
    %c0_i32 = arith.constant 0 : i32
    %c0_i32_0 = arith.constant 0 : i32
    return %arg0, %c0_i32 : i32, i32
  }
  func.func @transform_1(%arg0: i32) -> (i32, i32) {
    %c0_i32 = arith.constant 0 : i32
    %c0_i32_0 = arith.constant 0 : i32
    %c0_i32_1 = arith.constant 0 : i32
    return %c0_i32, %c0_i32_0 : i32, i32
  }
  func.func @transform_2(%arg0: i32) -> (i32, i32) {
    %c0_i32 = arith.constant 0 : i32
    %c0_i32_0 = arith.constant 0 : i32
    %c0_i32_1 = arith.constant 0 : i32
    return %c0_i32, %c0_i32_0 : i32, i32
  }
  func.func @transform_3(%arg0: i32) -> (i32, i32) {
    %c0_i32 = arith.constant 0 : i32
    %c0_i32_0 = arith.constant 0 : i32
    %c0_i32_1 = arith.constant 0 : i32
    return %c0_i32, %c0_i32_0 : i32, i32
  }
  func.func @transform_4(%arg0: i32) -> (i32, i32) {
    %c0_i32 = arith.constant 0 : i32
    %c0_i32_0 = arith.constant 0 : i32
    %c0_i32_1 = arith.constant 0 : i32
    return %c0_i32, %c0_i32_0 : i32, i32
  }
  func.func @transform_5(%arg0: i32) -> (i32, i32) {
    %c0_i32 = arith.constant 0 : i32
    %c0_i32_0 = arith.constant 0 : i32
    %c0_i32_1 = arith.constant 0 : i32
    return %c0_i32, %c0_i32_0 : i32, i32
  }
  func.func @transform_6(%arg0: i32) -> (i32, i32) {
    %c0_i32 = arith.constant 0 : i32
    %c0_i32_0 = arith.constant 0 : i32
    %c0_i32_1 = arith.constant 0 : i32
    return %c0_i32, %c0_i32_0 : i32, i32
  }
  func.func @transform_7(%arg0: i32) -> (i32, i32) {
    %c0_i32 = arith.constant 0 : i32
    %c0_i32_0 = arith.constant 0 : i32
    %c0_i32_1 = arith.constant 0 : i32
    return %c0_i32, %c0_i32_0 : i32, i32
  }
  func.func @transform_8(%arg0: i32) -> (i32, i32) {
    %c0_i32 = arith.constant 0 : i32
    %c0_i32_0 = arith.constant 0 : i32
    %c0_i32_1 = arith.constant 0 : i32
    return %c0_i32, %c0_i32_0 : i32, i32
  }
  func.func @transform_9(%arg0: i32) -> (i32, i32) {
    %c0_i32 = arith.constant 0 : i32
    %c0_i32_0 = arith.constant 0 : i32
    %c0_i32_1 = arith.constant 0 : i32
    return %c0_i32, %c0_i32_0 : i32, i32
  }
  func.func @transform_10(%arg0: i32) -> (i32, i32) {
    %c0_i32 = arith.constant 0 : i32
    %c0_i32_0 = arith.constant 0 : i32
    %c0_i32_1 = arith.constant 0 : i32
    return %c0_i32, %c0_i32_0 : i32, i32
  }
  func.func @transform_11(%arg0: i32) -> (i32, i32) {
    %c0_i32 = arith.constant 0 : i32
    %c0_i32_0 = arith.constant 0 : i32
    %c0_i32_1 = arith.constant 0 : i32
    return %c0_i32, %c0_i32_0 : i32, i32
  }
  func.func @transform_12(%arg0: i32) -> (i32, i32) {
    %c0_i32 = arith.constant 0 : i32
    %c0_i32_0 = arith.constant 0 : i32
    return %arg0, %c0_i32 : i32, i32
  }
}

</mosaic_0001>

<llo_original>
// kernel: tpu_custom_call.1
$region0: #{tpu_custom_call.1}
  #allocation0 [shape = 'u32[]', space=smem, size = 0x4, offset = 0x4, fixed_abs, tag = 'smem constant byte address 0x4 - core index']
  #allocation1 [shape = 'u32[144,128]{1,0:T(1,128)}', space=vmem, size = 0x12000, scoped, tag = 'internal scratch']
  %s0 = inlined_call_operand.vmem [shape: f32[16,32], index: 0, kind: input, shape index: {}]
  %s1 = inlined_call_operand.vmem [shape: f32[1,32], index: 1, kind: input, shape index: {}]
  %s2 = inlined_call_operand.vmem [shape: f32[1,32], index: 2, kind: input, shape index: {}]
  %s3 = inlined_call_operand.vmem [shape: bf16[32,96], index: 3, kind: input, shape index: {}]
  %s4 = inlined_call_operand.vmem [shape: bf16[32,32], index: 4, kind: input, shape index: {}]
  %s5 = inlined_call_operand.vmem [shape: f32[1,32], index: 5, kind: input, shape index: {}]
  %s6 = inlined_call_operand.vmem [shape: f32[1,32], index: 6, kind: input, shape index: {}]
  %s7 = inlined_call_operand.vmem [shape: f32[1,32], index: 7, kind: input, shape index: {}]
  %s8 = inlined_call_operand.vmem [shape: bf16[32,128], index: 8, kind: input, shape index: {}]
  %s9 = inlined_call_operand.vmem [shape: f32[1,128], index: 9, kind: input, shape index: {}]
  %s10 = inlined_call_operand.vmem [shape: bf16[128,32], index: 10, kind: input, shape index: {}]
  %s11 = inlined_call_operand.vmem [shape: f32[1,32], index: 11, kind: input, shape index: {}]
  %s12 = inlined_call_operand.hbm [shape: f32[16,32], index: 12, kind: output, shape index: {}]
  %s13 = sld [smem:[#allocation0]]
  $region58: #{tpu_custom_call.1} parent=0
    _
  %s15 = ssub.s32 1, %s13
  %s16 = scalar_select 0, %s15, %s13
  $region1: #{tpu_custom_call.1} parent=0
    #allocation2 [shape = 'u8[8192]{0}', space=vmem, size = 0x2000, scoped, tag = 'output window, operand 0, single buffered']
    #allocation3 [shape = 's32[1]{0}', space=sflag, size = 0x4, scoped, tag = 'scoped memory for tpu_custom_call.1']
    %17 = vsyncpa [#allocation3], 0
    // Predicated region
    $region2: #{tpu_custom_call.1} parent=1 // pred_check
      _
    $region3: #{tpu_custom_call.1} parent=1 // pred_check_branch
      %19 = sbr.rel (0) target = $region5
    $region4: #{tpu_custom_call.1} parent=1 // pred_region
      _
    $region5: #{tpu_custom_call.1} parent=1 // pred_fallthru
      _
    // Predicated region
    $region6: #{tpu_custom_call.1} parent=1 // pred_check
      _
    $region7: #{tpu_custom_call.1} parent=1 // pred_check_branch
      %21 = sbr.rel (0) target = $region9
    $region8: #{tpu_custom_call.1} parent=1 // pred_region
      _
    $region9: #{tpu_custom_call.1} parent=1 // pred_fallthru
      _
    // Predicated region
    $region10: #{tpu_custom_call.1} parent=1 // pred_check
      _
    $region11: #{tpu_custom_call.1} parent=1 // pred_check_branch
      %23 = sbr.rel (0) target = $region13
    $region12: #{tpu_custom_call.1} parent=1 // pred_region
      _
    $region13: #{tpu_custom_call.1} parent=1 // pred_fallthru
      _
    // Predicated region
    $region14: #{tpu_custom_call.1} parent=1 // pred_check
      _
    $region15: #{tpu_custom_call.1} parent=1 // pred_check_branch
      %25 = sbr.rel (0) target = $region17
    $region16: #{tpu_custom_call.1} parent=1 // pred_region
      _
    $region17: #{tpu_custom_call.1} parent=1 // pred_fallthru
      _
    // Predicated region
    $region18: #{tpu_custom_call.1} parent=1 // pred_check
      _
    $region19: #{tpu_custom_call.1} parent=1 // pred_check_branch
      %27 = sbr.rel (0) target = $region21
    $region20: #{tpu_custom_call.1} parent=1 // pred_region
      _
    $region21: #{tpu_custom_call.1} parent=1 // pred_fallthru
      _
    // Predicated region
    $region22: #{tpu_custom_call.1} parent=1 // pred_check
      _
    $region23: #{tpu_custom_call.1} parent=1 // pred_check_branch
      %29 = sbr.rel (0) target = $region25
    $region24: #{tpu_custom_call.1} parent=1 // pred_region
      _
    $region25: #{tpu_custom_call.1} parent=1 // pred_fallthru
      _
    // Predicated region
    $region26: #{tpu_custom_call.1} parent=1 // pred_check
      _
    $region27: #{tpu_custom_call.1} parent=1 // pred_check_branch
      %31 = sbr.rel (0) target = $region29
    $region28: #{tpu_custom_call.1} parent=1 // pred_region
      _
    $region29: #{tpu_custom_call.1} parent=1 // pred_fallthru
      _
    // Predicated region
    $region30: #{tpu_custom_call.1} parent=1 // pred_check
      _
    $region31: #{tpu_custom_call.1} parent=1 // pred_check_branch
      %33 = sbr.rel (0) target = $region33
    $region32: #{tpu_custom_call.1} parent=1 // pred_region
      _
    $region33: #{tpu_custom_call.1} parent=1 // pred_fallthru
      _
    // Predicated region
    $region34: #{tpu_custom_call.1} parent=1 // pred_check
      _
    $region35: #{tpu_custom_call.1} parent=1 // pred_check_branch
      %35 = sbr.rel (0) target = $region37
    $region36: #{tpu_custom_call.1} parent=1 // pred_region
      _
    $region37: #{tpu_custom_call.1} parent=1 // pred_fallthru
      _
    // Predicated region
    $region38: #{tpu_custom_call.1} parent=1 // pred_check
      _
    $region39: #{tpu_custom_call.1} parent=1 // pred_check_branch
      %37 = sbr.rel (0) target = $region41
    $region40: #{tpu_custom_call.1} parent=1 // pred_region
      _
    $region41: #{tpu_custom_call.1} parent=1 // pred_fallthru
      _
    // Predicated region
    $region42: #{tpu_custom_call.1} parent=1 // pred_check
      _
    $region43: #{tpu_custom_call.1} parent=1 // pred_check_branch
      %39 = sbr.rel (0) target = $region45
    $region44: #{tpu_custom_call.1} parent=1 // pred_region
      _
    $region45: #{tpu_custom_call.1} parent=1 // pred_fallthru
      _
    // Predicated region
    $region46: #{tpu_custom_call.1} parent=1 // pred_check
      _
    $region47: #{tpu_custom_call.1} parent=1 // pred_check_branch
      %41 = sbr.rel (0) target = $region49
    $region48: #{tpu_custom_call.1} parent=1 // pred_region
      _
    $region49: #{tpu_custom_call.1} parent=1 // pred_fallthru
      _
    %v43 = vld [vmem:[%s0] sm:$0xff]
    %v44 = vld [vmem:[%s0 + $0x8] sm:$0xff]
    %v45 = vld [vmem:[%s1] sm:$0x1]
    %v46 = vld [vmem:[%s2] sm:$0x1]
    %vm47 = vcmask 261120
    %v48 = vsel %vm47, %v43, 0.0
    %49 = vadd.xlane.f32.xlu0 %v48
    %v50 = vpop.xlane.xlu0 %49
    %v51 = vsel %vm47, %v44, 0.0
    %52 = vadd.xlane.f32.xlu0 %v51
    %v53 = vpop.xlane.xlu0 %52
    %v54 = vrcp.pop 32.0
    %v55 = vmul.f32 %v50, %v54
    %v56 = vmul.f32 %v53, %v54
    %v57 = vsub.f32 %v43, %v55
    %v58 = vsub.f32 %v44, %v56
    %v59 = vmul.f32 %v57, %v57
    %v60 = vmul.f32 %v58, %v58
    %v61 = vsel %vm47, %v59, 0.0
    %62 = vadd.xlane.f32.xlu0 %v61
    %v63 = vpop.xlane.xlu0 %62
    %v64 = vsel %vm47, %v60, 0.0
    %65 = vadd.xlane.f32.xlu0 %v64
    %v66 = vpop.xlane.xlu0 %65
    %v67 = vmul.f32 %v63, %v54
    %v68 = vmul.f32 %v66, %v54
    %v69 = vadd.f32 %v67, 1e-05
    %v70 = vadd.f32 %v68, 1e-05
    %v71 = vrsqrt.pop %v69
    %v72 = vrsqrt.pop %v70
    %v73 = vmul.f32 %v57, %v71
    %v74 = vmul.f32 %v58, %v72
    %v76 = vlaneseq
    %v77 = vshrl.u32 %v76, 7
    %v78 = vsub.s32 0, %v77
    %v79 = vrot.slane %v45, %v78
    %v81 = vmul.f32 %v73, %v79
    %v82 = vmul.f32 %v74, %v79
    %v84 = vlaneseq
    %v85 = vshrl.u32 %v84, 7
    %v86 = vsub.s32 0, %v85
    %v87 = vrot.slane %v46, %v86
    %v89 = vadd.f32 %v81, %v87
    %v90 = vadd.f32 %v82, %v87
    %v91 = vpack.c.bf16 %v90, %v89
    %v92 = vld [vmem:[%s3] sm:$0xf]
    %v93 = vld [vmem:[%s3 + $0x4] sm:$0xf]
    %v94 = vld [vmem:[%s3 + $0x8] sm:$0xf]
    %v95 = vld [vmem:[%s3 + $0xc] sm:$0xf]
    %v100 = vunpack.c.l.b16 %v92
    %v101 = vunpack.c.l.b16 %v93
    %v102 = vunpack.c.l.b16 %v94
    %v103 = vunpack.c.l.b16 %v95
    %v104 = vpack.c.b16 %v101, %v100
    %v105 = vpack.c.b16 %v103, %v102
    %v109 = vsel %vm47, %v91, 0
    %111 = vmatprep.subr.bf16.mxu0 0
    %112 = vmatpush1.bf16.msra.mxu0 %v104
    %113 = vmatprep.subr.bf16.mxu0 0
    %114 = vmatpush1.bf16.msra.mxu0 %v105
    %115 = vmatprep.subr.bf16.mxu0 0
    %116 = vmatpush1.bf16.msra.mxu0 0
    %117 = vmatprep.subr.bf16.mxu0 0
    %118 = vmatpush1.bf16.msra.mxu0 0
    %119 = vmatprep.subr.bf16.mxu0 0
    %120 = vmatpush1.bf16.msra.mxu0 0
    %121 = vmatprep.subr.bf16.mxu0 0
    %122 = vmatpush1.bf16.msra.mxu0 0
    %123 = vmatprep.subr.bf16.mxu0 0
    %124 = vmatpush1.bf16.msra.mxu0 0
    %125 = vmatprep.subr.bf16.mxu0 0
    %126 = vmatpush1.bf16.msra.mxu0 0
    %127 = vmatprep.subr.bf16.mxu0 0
    %128 = vmatpush1.bf16.msra.mxu0 0
    %129 = vmatprep.subr.bf16.mxu0 0
    %130 = vmatpush1.bf16.msra.mxu0 0
    %131 = vmatprep.subr.bf16.mxu0 0
    %132 = vmatpush1.bf16.msra.mxu0 0
    %133 = vmatprep.subr.bf16.mxu0 0
    %134 = vmatpush1.bf16.msra.mxu0 0
    %135 = vmatprep.subr.bf16.mxu0 0
    %136 = vmatpush1.bf16.msra.mxu0 0
    %137 = vmatprep.subr.bf16.mxu0 0
    %138 = vmatpush1.bf16.msra.mxu0 0
    %139 = vmatprep.subr.bf16.mxu0 0
    %140 = vmatpush1.bf16.msra.mxu0 0
    %141 = vmatprep.subr.bf16.mxu0 0
    %142 = vmatpush1.bf16.msra.mxu0 0
    %143 = vmatprep.mubr.bf16.mxu0 0
    %144 = vmatmul.mubr.bf16.gmra.mrb[0].mxu0 %v109
    %v145 = vpop.f32.mrb[0].mxu0
    %v146 = vadd.f32 0.0, %v145
    %v147 = vpop.f32.mrb[0].mxu0
    %v148 = vpop.f32.mrb[0].mxu0
    %v149 = vadd.f32 0.0, %v148
    %v150 = vpop.f32.mrb[0].mxu0
    %151 = vdwg.mxu0
    %v152 = vlaneseq
    %v153 = vshrl.u32 %v152, 7
    %v154 = vlaneseq
    %v155 = vand.u32 %v154, 127
    %vm156 = vcmp.ge.s32.totalorder %v153, %v155
    %158 = vrot.lane.b32.xlu0 %v146, 96
    %v159 = vpop.permute.xlu0 %158
    %vm160 = vcmask 64512
    %v161 = vsel %vm160, %v146, 0
    %v163 = vsel %vm160, %v159, 0
    %165 = vmatprep.subr.mxu0 0.0
    %166 = vmatpush1.xpose.msra.mxu0 %v163
    %167 = vmatprep.subr.mxu0 0.0
    %168 = vmatpush1.xpose.msra.mxu0 0.0
    %169 = vmatprep.subr.mxu0 0.0
    %170 = vmatpush1.xpose.msra.mxu0 0.0
    %171 = vmatprep.subr.mxu0 0.0
    %172 = vmatpush1.xpose.msra.mxu0 0.0
    %173 = vmatprep.subr.mxu0 0.0
    %174 = vmatpush1.xpose.msra.mxu0 0.0
    %175 = vmatprep.subr.mxu0 0.0
    %176 = vmatpush1.xpose.msra.mxu0 0.0
    %177 = vmatprep.subr.mxu0 0.0
    %178 = vmatpush1.xpose.msra.mxu0 0.0
    %179 = vmatprep.subr.mxu0 0.0
    %180 = vmatpush1.xpose.msra.mxu0 0.0
    %181 = vmatprep.subr.mxu0 0.0
    %182 = vmatpush1.xpose.msra.mxu0 0.0
    %183 = vmatprep.subr.mxu0 0.0
    %184 = vmatpush1.xpose.msra.mxu0 0.0
    %185 = vmatprep.subr.mxu0 0.0
    %186 = vmatpush1.xpose.msra.mxu0 0.0
    %187 = vmatprep.subr.mxu0 0.0
    %188 = vmatpush1.xpose.msra.mxu0 0.0
    %189 = vmatprep.subr.mxu0 0.0
    %190 = vmatpush1.xpose.msra.mxu0 0.0
    %191 = vmatprep.subr.mxu0 0.0
    %192 = vmatpush1.xpose.msra.mxu0 0.0
    %193 = vmatprep.subr.mxu0 0.0
    %194 = vmatpush1.xpose.msra.mxu0 0.0
    %195 = vmatprep.subr.mxu0 0.0
    %196 = vmatpush1.xpose.msra.mxu0 0.0
    %197 = vmatprep.subr.mxu0 0.0
    %198 = vmatpush1.xpose.msra.mxu0 0.0
    %199 = vmatprep.subr.mxu0 0.0
    %200 = vmatpush1.xpose.msra.mxu0 0.0
    %201 = vmatprep.subr.mxu0 0.0
    %202 = vmatpush1.xpose.msra.mxu0 0.0
    %203 = vmatprep.subr.mxu0 0.0
    %204 = vmatpush1.xpose.msra.mxu0 0.0
    %205 = vmatprep.subr.mxu0 0.0
    %206 = vmatpush1.xpose.msra.mxu0 0.0
    %207 = vmatprep.subr.mxu0 0.0
    %208 = vmatpush1.xpose.msra.mxu0 0.0
    %209 = vmatprep.subr.mxu0 0.0
    %210 = vmatpush1.xpose.msra.mxu0 0.0
    %211 = vmatprep.subr.mxu0 0.0
    %212 = vmatpush1.xpose.msra.mxu0 0.0
    %213 = vmatprep.subr.mxu0 0.0
    %214 = vmatpush1.xpose.msra.mxu0 0.0
    %215 = vmatprep.subr.mxu0 0.0
    %216 = vmatpush1.xpose.msra.mxu0 0.0
    %217 = vmatprep.subr.mxu0 0.0
    %218 = vmatpush1.xpose.msra.mxu0 0.0
    %219 = vmatprep.subr.mxu0 0.0
    %220 = vmatpush1.xpose.msra.mxu0 0.0
    %221 = vmatprep.subr.mxu0 0.0
    %222 = vmatpush1.xpose.msra.mxu0 0.0
    %223 = vmatprep.subr.mxu0 0.0
    %224 = vmatpush1.xpose.msra.mxu0 0.0
    %225 = vmatprep.subr.mxu0 0.0
    %226 = vmatpush1.xpose.msra.mxu0 0.0
    %227 = vmatprep.subr.mxu0 0.0
    %228 = vmatpush1.xpose.msra.mxu0 0.0
    %229 = vmatprep.mubr.f32.mxu0 0.0
    %230 = vmatmul.mubr.f32.gmra.mrb[0].mxu0 %v161
    %v231 = vpop.f32.mrb[0].mxu0
    %v232 = vadd.f32 0.0, %v231
    %v233 = vpop.f32.mrb[0].mxu0
    %234 = vdwg.mxu0
    %236 = vrot.lane.b32.xlu0 %v149, 96
    %v237 = vpop.permute.xlu0 %236
    %v238 = vsel %vm160, %v149, 0
    %v240 = vsel %vm160, %v237, 0
    %242 = vmatprep.subr.mxu0 0.0
    %243 = vmatpush1.xpose.msra.mxu0 %v240
    %244 = vmatprep.subr.mxu0 0.0
    %245 = vmatpush1.xpose.msra.mxu0 0.0
    %246 = vmatprep.subr.mxu0 0.0
    %247 = vmatpush1.xpose.msra.mxu0 0.0
    %248 = vmatprep.subr.mxu0 0.0
    %249 = vmatpush1.xpose.msra.mxu0 0.0
    %250 = vmatprep.subr.mxu0 0.0
    %251 = vmatpush1.xpose.msra.mxu0 0.0
    %252 = vmatprep.subr.mxu0 0.0
    %253 = vmatpush1.xpose.msra.mxu0 0.0
    %254 = vmatprep.subr.mxu0 0.0
    %255 = vmatpush1.xpose.msra.mxu0 0.0
    %256 = vmatprep.subr.mxu0 0.0
    %257 = vmatpush1.xpose.msra.mxu0 0.0
    %258 = vmatprep.subr.mxu0 0.0
    %259 = vmatpush1.xpose.msra.mxu0 0.0
    %260 = vmatprep.subr.mxu0 0.0
    %261 = vmatpush1.xpose.msra.mxu0 0.0
    %262 = vmatprep.subr.mxu0 0.0
    %263 = vmatpush1.xpose.msra.mxu0 0.0
    %264 = vmatprep.subr.mxu0 0.0
    %265 = vmatpush1.xpose.msra.mxu0 0.0
    %266 = vmatprep.subr.mxu0 0.0
    %267 = vmatpush1.xpose.msra.mxu0 0.0
    %268 = vmatprep.subr.mxu0 0.0
    %269 = vmatpush1.xpose.msra.mxu0 0.0
    %270 = vmatprep.subr.mxu0 0.0
    %271 = vmatpush1.xpose.msra.mxu0 0.0
    %272 = vmatprep.subr.mxu0 0.0
    %273 = vmatpush1.xpose.msra.mxu0 0.0
    %274 = vmatprep.subr.mxu0 0.0
    %275 = vmatpush1.xpose.msra.mxu0 0.0
    %276 = vmatprep.subr.mxu0 0.0
    %277 = vmatpush1.xpose.msra.mxu0 0.0
    %278 = vmatprep.subr.mxu0 0.0
    %279 = vmatpush1.xpose.msra.mxu0 0.0
    %280 = vmatprep.subr.mxu0 0.0
    %281 = vmatpush1.xpose.msra.mxu0 0.0
    %282 = vmatprep.subr.mxu0 0.0
    %283 = vmatpush1.xpose.msra.mxu0 0.0
    %284 = vmatprep.subr.mxu0 0.0
    %285 = vmatpush1.xpose.msra.mxu0 0.0
    %286 = vmatprep.subr.mxu0 0.0
    %287 = vmatpush1.xpose.msra.mxu0 0.0
    %288 = vmatprep.subr.mxu0 0.0
    %289 = vmatpush1.xpose.msra.mxu0 0.0
    %290 = vmatprep.subr.mxu0 0.0
    %291 = vmatpush1.xpose.msra.mxu0 0.0
    %292 = vmatprep.subr.mxu0 0.0
    %293 = vmatpush1.xpose.msra.mxu0 0.0
    %294 = vmatprep.subr.mxu0 0.0
    %295 = vmatpush1.xpose.msra.mxu0 0.0
    %296 = vmatprep.subr.mxu0 0.0
    %297 = vmatpush1.xpose.msra.mxu0 0.0
    %298 = vmatprep.subr.mxu0 0.0
    %299 = vmatpush1.xpose.msra.mxu0 0.0
    %300 = vmatprep.subr.mxu0 0.0
    %301 = vmatpush1.xpose.msra.mxu0 0.0
    %302 = vmatprep.subr.mxu0 0.0
    %303 = vmatpush1.xpose.msra.mxu0 0.0
    %304 = vmatprep.subr.mxu0 0.0
    %305 = vmatpush1.xpose.msra.mxu0 0.0
    %306 = vmatprep.mubr.f32.mxu0 0.0
    %307 = vmatmul.mubr.f32.gmra.mrb[0].mxu0 %v238
    %v308 = vpop.f32.mrb[0].mxu0
    %v309 = vadd.f32 0.0, %v308
    %v310 = vpop.f32.mrb[0].mxu0
    %311 = vdwg.mxu0
    %v312 = vmul.f32 %v232, 0.17677669
    %v313 = vmul.f32 %v309, 0.17677669
    %v314 = vsel %vm156, 1, 0
    %vm315 = vcmp.eq.s32.totalorder %v314, 1
    %v316 = vsel %vm315, %v312, -inf
    %v317 = vsel %vm315, %v313, -inf
    %v318 = vsel %vm160, %v316, -inf
    %319 = vmax.xlane.f32.xlu0 %v318
    %v320 = vpop.xlane.xlu0 %319
    %v321 = vsel %vm160, %v317, -inf
    %322 = vmax.xlane.f32.xlu0 %v321
    %v323 = vpop.xlane.xlu0 %322
    %v324 = vsub.f32 %v316, %v320
    %v325 = vsub.f32 %v317, %v323
    %v326 = vmul.f32 %v324, 1.442695
    %v327 = vpow.pop %v326
    %v328 = vmul.f32 %v325, 1.442695
    %v329 = vpow.pop %v328
    %v330 = vsel %vm160, %v327, 0.0
    %331 = vadd.xlane.f32.xlu0 %v330
    %v332 = vpop.xlane.xlu0 %331
    %v333 = vsel %vm160, %v329, 0.0
    %334 = vadd.xlane.f32.xlu0 %v333
    %v335 = vpop.xlane.xlu0 %334
    %v336 = vrcp.pop %v332
    %v337 = vrcp.pop %v335
    %v338 = vmul.f32 %v327, %v336
    %v339 = vmul.f32 %v329, %v337
    %340 = vrot.lane.b32.xlu0 %v146, 64
    %v341 = vpop.permute.xlu0 %340
    %v344 = vsel %vm160, %v338, 0
    %346 = vmatprep.subr.mxu0 0.0
    %347 = vmatpush1.msra.mxu0 %v341
    %348 = vmatprep.subr.mxu0 0.0
    %349 = vmatpush1.msra.mxu0 0.0
    %350 = vmatprep.subr.mxu0 0.0
    %351 = vmatpush1.msra.mxu0 0.0
    %352 = vmatprep.subr.mxu0 0.0
    %353 = vmatpush1.msra.mxu0 0.0
    %354 = vmatprep.subr.mxu0 0.0
    %355 = vmatpush1.msra.mxu0 0.0
    %356 = vmatprep.subr.mxu0 0.0
    %357 = vmatpush1.msra.mxu0 0.0
    %358 = vmatprep.subr.mxu0 0.0
    %359 = vmatpush1.msra.mxu0 0.0
    %360 = vmatprep.subr.mxu0 0.0
    %361 = vmatpush1.msra.mxu0 0.0
    %362 = vmatprep.subr.mxu0 0.0
    %363 = vmatpush1.msra.mxu0 0.0
    %364 = vmatprep.subr.mxu0 0.0
    %365 = vmatpush1.msra.mxu0 0.0
    %366 = vmatprep.subr.mxu0 0.0
    %367 = vmatpush1.msra.mxu0 0.0
    %368 = vmatprep.subr.mxu0 0.0
    %369 = vmatpush1.msra.mxu0 0.0
    %370 = vmatprep.subr.mxu0 0.0
    %371 = vmatpush1.msra.mxu0 0.0
    %372 = vmatprep.subr.mxu0 0.0
    %373 = vmatpush1.msra.mxu0 0.0
    %374 = vmatprep.subr.mxu0 0.0
    %375 = vmatpush1.msra.mxu0 0.0
    %376 = vmatprep.subr.mxu0 0.0
    %377 = vmatpush1.msra.mxu0 0.0
    %378 = vmatprep.subr.mxu0 0.0
    %379 = vmatpush1.msra.mxu0 0.0
    %380 = vmatprep.subr.mxu0 0.0
    %381 = vmatpush1.msra.mxu0 0.0
    %382 = vmatprep.subr.mxu0 0.0
    %383 = vmatpush1.msra.mxu0 0.0
    %384 = vmatprep.subr.mxu0 0.0
    %385 = vmatpush1.msra.mxu0 0.0
    %386 = vmatprep.subr.mxu0 0.0
    %387 = vmatpush1.msra.mxu0 0.0
    %388 = vmatprep.subr.mxu0 0.0
    %389 = vmatpush1.msra.mxu0 0.0
    %390 = vmatprep.subr.mxu0 0.0
    %391 = vmatpush1.msra.mxu0 0.0
    %392 = vmatprep.subr.mxu0 0.0
    %393 = vmatpush1.msra.mxu0 0.0
    %394 = vmatprep.subr.mxu0 0.0
    %395 = vmatpush1.msra.mxu0 0.0
    %396 = vmatprep.subr.mxu0 0.0
    %397 = vmatpush1.msra.mxu0 0.0
    %398 = vmatprep.subr.mxu0 0.0
    %399 = vmatpush1.msra.mxu0 0.0
    %400 = vmatprep.subr.mxu0 0.0
    %401 = vmatpush1.msra.mxu0 0.0
    %402 = vmatprep.subr.mxu0 0.0
    %403 = vmatpush1.msra.mxu0 0.0
    %404 = vmatprep.subr.mxu0 0.0
    %405 = vmatpush1.msra.mxu0 0.0
    %406 = vmatprep.subr.mxu0 0.0
    %407 = vmatpush1.msra.mxu0 0.0
    %408 = vmatprep.subr.mxu0 0.0
    %409 = vmatpush1.msra.mxu0 0.0
    %410 = vmatprep.mubr.f32.mxu0 0.0
    %411 = vmatmul.mubr.f32.gmra.mrb[0].mxu0 %v344
    %v412 = vpop.f32.mrb[0].mxu0
    %v413 = vadd.f32 0.0, %v412
    %v414 = vpop.f32.mrb[0].mxu0
    %415 = vdwg.mxu0
    %416 = vrot.lane.b32.xlu0 %v149, 64
    %v417 = vpop.permute.xlu0 %416
    %v420 = vsel %vm160, %v339, 0
    %422 = vmatprep.subr.mxu0 0.0
    %423 = vmatpush1.msra.mxu0 %v417
    %424 = vmatprep.subr.mxu0 0.0
    %425 = vmatpush1.msra.mxu0 0.0
    %426 = vmatprep.subr.mxu0 0.0
    %427 = vmatpush1.msra.mxu0 0.0
    %428 = vmatprep.subr.mxu0 0.0
    %429 = vmatpush1.msra.mxu0 0.0
    %430 = vmatprep.subr.mxu0 0.0
    %431 = vmatpush1.msra.mxu0 0.0
    %432 = vmatprep.subr.mxu0 0.0
    %433 = vmatpush1.msra.mxu0 0.0
    %434 = vmatprep.subr.mxu0 0.0
    %435 = vmatpush1.msra.mxu0 0.0
    %436 = vmatprep.subr.mxu0 0.0
    %437 = vmatpush1.msra.mxu0 0.0
    %438 = vmatprep.subr.mxu0 0.0
    %439 = vmatpush1.msra.mxu0 0.0
    %440 = vmatprep.subr.mxu0 0.0
    %441 = vmatpush1.msra.mxu0 0.0
    %442 = vmatprep.subr.mxu0 0.0
    %443 = vmatpush1.msra.mxu0 0.0
    %444 = vmatprep.subr.mxu0 0.0
    %445 = vmatpush1.msra.mxu0 0.0
    %446 = vmatprep.subr.mxu0 0.0
    %447 = vmatpush1.msra.mxu0 0.0
    %448 = vmatprep.subr.mxu0 0.0
    %449 = vmatpush1.msra.mxu0 0.0
    %450 = vmatprep.subr.mxu0 0.0
    %451 = vmatpush1.msra.mxu0 0.0
    %452 = vmatprep.subr.mxu0 0.0
    %453 = vmatpush1.msra.mxu0 0.0
    %454 = vmatprep.subr.mxu0 0.0
    %455 = vmatpush1.msra.mxu0 0.0
    %456 = vmatprep.subr.mxu0 0.0
    %457 = vmatpush1.msra.mxu0 0.0
    %458 = vmatprep.subr.mxu0 0.0
    %459 = vmatpush1.msra.mxu0 0.0
    %460 = vmatprep.subr.mxu0 0.0
    %461 = vmatpush1.msra.mxu0 0.0
    %462 = vmatprep.subr.mxu0 0.0
    %463 = vmatpush1.msra.mxu0 0.0
    %464 = vmatprep.subr.mxu0 0.0
    %465 = vmatpush1.msra.mxu0 0.0
    %466 = vmatprep.subr.mxu0 0.0
    %467 = vmatpush1.msra.mxu0 0.0
    %468 = vmatprep.subr.mxu0 0.0
    %469 = vmatpush1.msra.mxu0 0.0
    %470 = vmatprep.subr.mxu0 0.0
    %471 = vmatpush1.msra.mxu0 0.0
    %472 = vmatprep.subr.mxu0 0.0
    %473 = vmatpush1.msra.mxu0 0.0
    %474 = vmatprep.subr.mxu0 0.0
    %475 = vmatpush1.msra.mxu0 0.0
    %476 = vmatprep.subr.mxu0 0.0
    %477 = vmatpush1.msra.mxu0 0.0
    %478 = vmatprep.subr.mxu0 0.0
    %479 = vmatpush1.msra.mxu0 0.0
    %480 = vmatprep.subr.mxu0 0.0
    %481 = vmatpush1.msra.mxu0 0.0
    %482 = vmatprep.subr.mxu0 0.0
    %483 = vmatpush1.msra.mxu0 0.0
    %484 = vmatprep.subr.mxu0 0.0
    %485 = vmatpush1.msra.mxu0 0.0
    %486 = vmatprep.mubr.f32.mxu0 0.0
    %487 = vmatmul.mubr.f32.gmra.mrb[0].mxu0 %v420
    %v488 = vpop.f32.mrb[0].mxu0
    %v489 = vadd.f32 0.0, %v488
    %v490 = vpop.f32.mrb[0].mxu0
    %491 = vdwg.mxu0
    %492 = vrot.lane.b32.xlu0 %v146, 120
    %v493 = vpop.permute.xlu0 %492
    %494 = vrot.lane.b32.xlu0 %v146, 88
    %v495 = vpop.permute.xlu0 %494
    %v496 = vsel %vm160, %v493, 0
    %v498 = vsel %vm160, %v495, 0
    %500 = vmatprep.subr.mxu0 0.0
    %501 = vmatpush1.xpose.msra.mxu0 %v498
    %502 = vmatprep.subr.mxu0 0.0
    %503 = vmatpush1.xpose.msra.mxu0 0.0
    %504 = vmatprep.subr.mxu0 0.0
    %505 = vmatpush1.xpose.msra.mxu0 0.0
    %506 = vmatprep.subr.mxu0 0.0
    %507 = vmatpush1.xpose.msra.mxu0 0.0
    %508 = vmatprep.subr.mxu0 0.0
    %509 = vmatpush1.xpose.msra.mxu0 0.0
    %510 = vmatprep.subr.mxu0 0.0
    %511 = vmatpush1.xpose.msra.mxu0 0.0
    %512 = vmatprep.subr.mxu0 0.0
    %513 = vmatpush1.xpose.msra.mxu0 0.0
    %514 = vmatprep.subr.mxu0 0.0
    %515 = vmatpush1.xpose.msra.mxu0 0.0
    %516 = vmatprep.subr.mxu0 0.0
    %517 = vmatpush1.xpose.msra.mxu0 0.0
    %518 = vmatprep.subr.mxu0 0.0
    %519 = vmatpush1.xpose.msra.mxu0 0.0
    %520 = vmatprep.subr.mxu0 0.0
    %521 = vmatpush1.xpose.msra.mxu0 0.0
    %522 = vmatprep.subr.mxu0 0.0
    %523 = vmatpush1.xpose.msra.mxu0 0.0
    %524 = vmatprep.subr.mxu0 0.0
    %525 = vmatpush1.xpose.msra.mxu0 0.0
    %526 = vmatprep.subr.mxu0 0.0
    %527 = vmatpush1.xpose.msra.mxu0 0.0
    %528 = vmatprep.subr.mxu0 0.0
    %529 = vmatpush1.xpose.msra.mxu0 0.0
    %530 = vmatprep.subr.mxu0 0.0
    %531 = vmatpush1.xpose.msra.mxu0 0.0
    %532 = vmatprep.subr.mxu0 0.0
    %533 = vmatpush1.xpose.msra.mxu0 0.0
    %534 = vmatprep.subr.mxu0 0.0
    %535 = vmatpush1.xpose.msra.mxu0 0.0
    %536 = vmatprep.subr.mxu0 0.0
    %537 = vmatpush1.xpose.msra.mxu0 0.0
    %538 = vmatprep.subr.mxu0 0.0
    %539 = vmatpush1.xpose.msra.mxu0 0.0
    %540 = vmatprep.subr.mxu0 0.0
    %541 = vmatpush1.xpose.msra.mxu0 0.0
    %542 = vmatprep.subr.mxu0 0.0
    %543 = vmatpush1.xpose.msra.mxu0 0.0
    %544 = vmatprep.subr.mxu0 0.0
    %545 = vmatpush1.xpose.msra.mxu0 0.0
    %546 = vmatprep.subr.mxu0 0.0
    %547 = vmatpush1.xpose.msra.mxu0 0.0
    %548 = vmatprep.subr.mxu0 0.0
    %549 = vmatpush1.xpose.msra.mxu0 0.0
    %550 = vmatprep.subr.mxu0 0.0
    %551 = vmatpush1.xpose.msra.mxu0 0.0
    %552 = vmatprep.subr.mxu0 0.0
    %553 = vmatpush1.xpose.msra.mxu0 0.0
    %554 = vmatprep.subr.mxu0 0.0
    %555 = vmatpush1.xpose.msra.mxu0 0.0
    %556 = vmatprep.subr.mxu0 0.0
    %557 = vmatpush1.xpose.msra.mxu0 0.0
    %558 = vmatprep.subr.mxu0 0.0
    %559 = vmatpush1.xpose.msra.mxu0 0.0
    %560 = vmatprep.subr.mxu0 0.0
    %561 = vmatpush1.xpose.msra.mxu0 0.0
    %562 = vmatprep.subr.mxu0 0.0
    %563 = vmatpush1.xpose.msra.mxu0 0.0
    %564 = vmatprep.mubr.f32.mxu0 0.0
    %565 = vmatmul.mubr.f32.gmra.mrb[0].mxu0 %v496
    %v566 = vpop.f32.mrb[0].mxu0
    %v567 = vadd.f32 0.0, %v566
    %v568 = vpop.f32.mrb[0].mxu0
    %569 = vdwg.mxu0
    %570 = vrot.lane.b32.xlu0 %v149, 120
    %v571 = vpop.permute.xlu0 %570
    %572 = vrot.lane.b32.xlu0 %v149, 88
    %v573 = vpop.permute.xlu0 %572
    %v574 = vsel %vm160, %v571, 0
    %v576 = vsel %vm160, %v573, 0
    %578 = vmatprep.subr.mxu0 0.0
    %579 = vmatpush1.xpose.msra.mxu0 %v576
    %580 = vmatprep.subr.mxu0 0.0
    %581 = vmatpush1.xpose.msra.mxu0 0.0
    %582 = vmatprep.subr.mxu0 0.0
    %583 = vmatpush1.xpose.msra.mxu0 0.0
    %584 = vmatprep.subr.mxu0 0.0
    %585 = vmatpush1.xpose.msra.mxu0 0.0
    %586 = vmatprep.subr.mxu0 0.0
    %587 = vmatpush1.xpose.msra.mxu0 0.0
    %588 = vmatprep.subr.mxu0 0.0
    %589 = vmatpush1.xpose.msra.mxu0 0.0
    %590 = vmatprep.subr.mxu0 0.0
    %591 = vmatpush1.xpose.msra.mxu0 0.0
    %592 = vmatprep.subr.mxu0 0.0
    %593 = vmatpush1.xpose.msra.mxu0 0.0
    %594 = vmatprep.subr.mxu0 0.0
    %595 = vmatpush1.xpose.msra.mxu0 0.0
    %596 = vmatprep.subr.mxu0 0.0
    %597 = vmatpush1.xpose.msra.mxu0 0.0
    %598 = vmatprep.subr.mxu0 0.0
    %599 = vmatpush1.xpose.msra.mxu0 0.0
    %600 = vmatprep.subr.mxu0 0.0
    %601 = vmatpush1.xpose.msra.mxu0 0.0
    %602 = vmatprep.subr.mxu0 0.0
    %603 = vmatpush1.xpose.msra.mxu0 0.0
    %604 = vmatprep.subr.mxu0 0.0
    %605 = vmatpush1.xpose.msra.mxu0 0.0
    %606 = vmatprep.subr.mxu0 0.0
    %607 = vmatpush1.xpose.msra.mxu0 0.0
    %608 = vmatprep.subr.mxu0 0.0
    %609 = vmatpush1.xpose.msra.mxu0 0.0
    %610 = vmatprep.subr.mxu0 0.0
    %611 = vmatpush1.xpose.msra.mxu0 0.0
    %612 = vmatprep.subr.mxu0 0.0
    %613 = vmatpush1.xpose.msra.mxu0 0.0
    %614 = vmatprep.subr.mxu0 0.0
    %615 = vmatpush1.xpose.msra.mxu0 0.0
    %616 = vmatprep.subr.mxu0 0.0
    %617 = vmatpush1.xpose.msra.mxu0 0.0
    %618 = vmatprep.subr.mxu0 0.0
    %619 = vmatpush1.xpose.msra.mxu0 0.0
    %620 = vmatprep.subr.mxu0 0.0
    %621 = vmatpush1.xpose.msra.mxu0 0.0
    %622 = vmatprep.subr.mxu0 0.0
    %623 = vmatpush1.xpose.msra.mxu0 0.0
    %624 = vmatprep.subr.mxu0 0.0
    %625 = vmatpush1.xpose.msra.mxu0 0.0
    %626 = vmatprep.subr.mxu0 0.0
    %627 = vmatpush1.xpose.msra.mxu0 0.0
    %628 = vmatprep.subr.mxu0 0.0
    %629 = vmatpush1.xpose.msra.mxu0 0.0
    %630 = vmatprep.subr.mxu0 0.0
    %631 = vmatpush1.xpose.msra.mxu0 0.0
    %632 = vmatprep.subr.mxu0 0.0
    %633 = vmatpush1.xpose.msra.mxu0 0.0
    %634 = vmatprep.subr.mxu0 0.0
    %635 = vmatpush1.xpose.msra.mxu0 0.0
    %636 = vmatprep.subr.mxu0 0.0
    %637 = vmatpush1.xpose.msra.mxu0 0.0
    %638 = vmatprep.subr.mxu0 0.0
    %639 = vmatpush1.xpose.msra.mxu0 0.0
    %640 = vmatprep.subr.mxu0 0.0
    %641 = vmatpush1.xpose.msra.mxu0 0.0
    %642 = vmatprep.mubr.f32.mxu0 0.0
    %643 = vmatmul.mubr.f32.gmra.mrb[0].mxu0 %v574
    %v644 = vpop.f32.mrb[0].mxu0
    %v645 = vadd.f32 0.0, %v644
    %v646 = vpop.f32.mrb[0].mxu0
    %647 = vdwg.mxu0
    %v648 = vmul.f32 %v567, 0.17677669
    %v649 = vmul.f32 %v645, 0.17677669
    %v650 = vsel %vm315, %v648, -inf
    %v651 = vsel %vm315, %v649, -inf
    %v652 = vsel %vm160, %v650, -inf
    %653 = vmax.xlane.f32.xlu0 %v652
    %v654 = vpop.xlane.xlu0 %653
    %v655 = vsel %vm160, %v651, -inf
    %656 = vmax.xlane.f32.xlu0 %v655
    %v657 = vpop.xlane.xlu0 %656
    %v658 = vsub.f32 %v650, %v654
    %v659 = vsub.f32 %v651, %v657
    %v660 = vmul.f32 %v658, 1.442695
    %v661 = vpow.pop %v660
    %v662 = vmul.f32 %v659, 1.442695
    %v663 = vpow.pop %v662
    %v664 = vsel %vm160, %v661, 0.0
    %665 = vadd.xlane.f32.xlu0 %v664
    %v666 = vpop.xlane.xlu0 %665
    %v667 = vsel %vm160, %v663, 0.0
    %668 = vadd.xlane.f32.xlu0 %v667
    %v669 = vpop.xlane.xlu0 %668
    %v670 = vrcp.pop %v666
    %v671 = vrcp.pop %v669
    %v672 = vmul.f32 %v661, %v670
    %v673 = vmul.f32 %v663, %v671
    %674 = vrot.lane.b32.xlu0 %v146, 56
    %v675 = vpop.permute.xlu0 %674
    %v678 = vsel %vm160, %v672, 0
    %680 = vmatprep.subr.mxu0 0.0
    %681 = vmatpush1.msra.mxu0 %v675
    %682 = vmatprep.subr.mxu0 0.0
    %683 = vmatpush1.msra.mxu0 0.0
    %684 = vmatprep.subr.mxu0 0.0
    %685 = vmatpush1.msra.mxu0 0.0
    %686 = vmatprep.subr.mxu0 0.0
    %687 = vmatpush1.msra.mxu0 0.0
    %688 = vmatprep.subr.mxu0 0.0
    %689 = vmatpush1.msra.mxu0 0.0
    %690 = vmatprep.subr.mxu0 0.0
    %691 = vmatpush1.msra.mxu0 0.0
    %692 = vmatprep.subr.mxu0 0.0
    %693 = vmatpush1.msra.mxu0 0.0
    %694 = vmatprep.subr.mxu0 0.0
    %695 = vmatpush1.msra.mxu0 0.0
    %696 = vmatprep.subr.mxu0 0.0
    %697 = vmatpush1.msra.mxu0 0.0
    %698 = vmatprep.subr.mxu0 0.0
    %699 = vmatpush1.msra.mxu0 0.0
    %700 = vmatprep.subr.mxu0 0.0
    %701 = vmatpush1.msra.mxu0 0.0
    %702 = vmatprep.subr.mxu0 0.0
    %703 = vmatpush1.msra.mxu0 0.0
    %704 = vmatprep.subr.mxu0 0.0
    %705 = vmatpush1.msra.mxu0 0.0
    %706 = vmatprep.subr.mxu0 0.0
    %707 = vmatpush1.msra.mxu0 0.0
    %708 = vmatprep.subr.mxu0 0.0
    %709 = vmatpush1.msra.mxu0 0.0
    %710 = vmatprep.subr.mxu0 0.0
    %711 = vmatpush1.msra.mxu0 0.0
    %712 = vmatprep.subr.mxu0 0.0
    %713 = vmatpush1.msra.mxu0 0.0
    %714 = vmatprep.subr.mxu0 0.0
    %715 = vmatpush1.msra.mxu0 0.0
    %716 = vmatprep.subr.mxu0 0.0
    %717 = vmatpush1.msra.mxu0 0.0
    %718 = vmatprep.subr.mxu0 0.0
    %719 = vmatpush1.msra.mxu0 0.0
    %720 = vmatprep.subr.mxu0 0.0
    %721 = vmatpush1.msra.mxu0 0.0
    %722 = vmatprep.subr.mxu0 0.0
    %723 = vmatpush1.msra.mxu0 0.0
    %724 = vmatprep.subr.mxu0 0.0
    %725 = vmatpush1.msra.mxu0 0.0
    %726 = vmatprep.subr.mxu0 0.0
    %727 = vmatpush1.msra.mxu0 0.0
    %728 = vmatprep.subr.mxu0 0.0
    %729 = vmatpush1.msra.mxu0 0.0
    %730 = vmatprep.subr.mxu0 0.0
    %731 = vmatpush1.msra.mxu0 0.0
    %732 = vmatprep.subr.mxu0 0.0
    %733 = vmatpush1.msra.mxu0 0.0
    %734 = vmatprep.subr.mxu0 0.0
    %735 = vmatpush1.msra.mxu0 0.0
    %736 = vmatprep.subr.mxu0 0.0
    %737 = vmatpush1.msra.mxu0 0.0
    %738 = vmatprep.subr.mxu0 0.0
    %739 = vmatpush1.msra.mxu0 0.0
    %740 = vmatprep.subr.mxu0 0.0
    %741 = vmatpush1.msra.mxu0 0.0
    %742 = vmatprep.subr.mxu0 0.0
    %743 = vmatpush1.msra.mxu0 0.0
    %744 = vmatprep.mubr.f32.mxu0 0.0
    %745 = vmatmul.mubr.f32.gmra.mrb[0].mxu0 %v678
    %v746 = vpop.f32.mrb[0].mxu0
    %v747 = vadd.f32 0.0, %v746
    %v748 = vpop.f32.mrb[0].mxu0
    %749 = vdwg.mxu0
    %750 = vrot.lane.b32.xlu0 %v149, 56
    %v751 = vpop.permute.xlu0 %750
    %v754 = vsel %vm160, %v673, 0
    %756 = vmatprep.subr.mxu0 0.0
    %757 = vmatpush1.msra.mxu0 %v751
    %758 = vmatprep.subr.mxu0 0.0
    %759 = vmatpush1.msra.mxu0 0.0
    %760 = vmatprep.subr.mxu0 0.0
    %761 = vmatpush1.msra.mxu0 0.0
    %762 = vmatprep.subr.mxu0 0.0
    %763 = vmatpush1.msra.mxu0 0.0
    %764 = vmatprep.subr.mxu0 0.0
    %765 = vmatpush1.msra.mxu0 0.0
    %766 = vmatprep.subr.mxu0 0.0
    %767 = vmatpush1.msra.mxu0 0.0
    %768 = vmatprep.subr.mxu0 0.0
    %769 = vmatpush1.msra.mxu0 0.0
    %770 = vmatprep.subr.mxu0 0.0
    %771 = vmatpush1.msra.mxu0 0.0
    %772 = vmatprep.subr.mxu0 0.0
    %773 = vmatpush1.msra.mxu0 0.0
    %774 = vmatprep.subr.mxu0 0.0
    %775 = vmatpush1.msra.mxu0 0.0
    %776 = vmatprep.subr.mxu0 0.0
    %777 = vmatpush1.msra.mxu0 0.0
    %778 = vmatprep.subr.mxu0 0.0
    %779 = vmatpush1.msra.mxu0 0.0
    %780 = vmatprep.subr.mxu0 0.0
    %781 = vmatpush1.msra.mxu0 0.0
    %782 = vmatprep.subr.mxu0 0.0
    %783 = vmatpush1.msra.mxu0 0.0
    %784 = vmatprep.subr.mxu0 0.0
    %785 = vmatpush1.msra.mxu0 0.0
    %786 = vmatprep.subr.mxu0 0.0
    %787 = vmatpush1.msra.mxu0 0.0
    %788 = vmatprep.subr.mxu0 0.0
    %789 = vmatpush1.msra.mxu0 0.0
    %790 = vmatprep.subr.mxu0 0.0
    %791 = vmatpush1.msra.mxu0 0.0
    %792 = vmatprep.subr.mxu0 0.0
    %793 = vmatpush1.msra.mxu0 0.0
    %794 = vmatprep.subr.mxu0 0.0
    %795 = vmatpush1.msra.mxu0 0.0
    %796 = vmatprep.subr.mxu0 0.0
    %797 = vmatpush1.msra.mxu0 0.0
    %798 = vmatprep.subr.mxu0 0.0
    %799 = vmatpush1.msra.mxu0 0.0
    %800 = vmatprep.subr.mxu0 0.0
    %801 = vmatpush1.msra.mxu0 0.0
    %802 = vmatprep.subr.mxu0 0.0
    %803 = vmatpush1.msra.mxu0 0.0
    %804 = vmatprep.subr.mxu0 0.0
    %805 = vmatpush1.msra.mxu0 0.0
    %806 = vmatprep.subr.mxu0 0.0
    %807 = vmatpush1.msra.mxu0 0.0
    %808 = vmatprep.subr.mxu0 0.0
    %809 = vmatpush1.msra.mxu0 0.0
    %810 = vmatprep.subr.mxu0 0.0
    %811 = vmatpush1.msra.mxu0 0.0
    %812 = vmatprep.subr.mxu0 0.0
    %813 = vmatpush1.msra.mxu0 0.0
    %814 = vmatprep.subr.mxu0 0.0
    %815 = vmatpush1.msra.mxu0 0.0
    %816 = vmatprep.subr.mxu0 0.0
    %817 = vmatpush1.msra.mxu0 0.0
    %818 = vmatprep.subr.mxu0 0.0
    %819 = vmatpush1.msra.mxu0 0.0
    %820 = vmatprep.mubr.f32.mxu0 0.0
    %821 = vmatmul.mubr.f32.gmra.mrb[0].mxu0 %v754
    %v822 = vpop.f32.mrb[0].mxu0
    %v823 = vadd.f32 0.0, %v822
    %v824 = vpop.f32.mrb[0].mxu0
    %825 = vdwg.mxu0
    %826 = vrot.lane.b32.xlu0 %v146, 112
    %v827 = vpop.permute.xlu0 %826
    %828 = vrot.lane.b32.xlu0 %v146, 80
    %v829 = vpop.permute.xlu0 %828
    %v830 = vsel %vm160, %v827, 0
    %v832 = vsel %vm160, %v829, 0
    %834 = vmatprep.subr.mxu0 0.0
    %835 = vmatpush1.xpose.msra.mxu0 %v832
    %836 = vmatprep.subr.mxu0 0.0
    %837 = vmatpush1.xpose.msra.mxu0 0.0
    %838 = vmatprep.subr.mxu0 0.0
    %839 = vmatpush1.xpose.msra.mxu0 0.0
    %840 = vmatprep.subr.mxu0 0.0
    %841 = vmatpush1.xpose.msra.mxu0 0.0
    %842 = vmatprep.subr.mxu0 0.0
    %843 = vmatpush1.xpose.msra.mxu0 0.0
    %844 = vmatprep.subr.mxu0 0.0
    %845 = vmatpush1.xpose.msra.mxu0 0.0
    %846 = vmatprep.subr.mxu0 0.0
    %847 = vmatpush1.xpose.msra.mxu0 0.0
    %848 = vmatprep.subr.mxu0 0.0
    %849 = vmatpush1.xpose.msra.mxu0 0.0
    %850 = vmatprep.subr.mxu0 0.0
    %851 = vmatpush1.xpose.msra.mxu0 0.0
    %852 = vmatprep.subr.mxu0 0.0
    %853 = vmatpush1.xpose.msra.mxu0 0.0
    %854 = vmatprep.subr.mxu0 0.0
    %855 = vmatpush1.xpose.msra.mxu0 0.0
    %856 = vmatprep.subr.mxu0 0.0
    %857 = vmatpush1.xpose.msra.mxu0 0.0
    %858 = vmatprep.subr.mxu0 0.0
    %859 = vmatpush1.xpose.msra.mxu0 0.0
    %860 = vmatprep.subr.mxu0 0.0
    %861 = vmatpush1.xpose.msra.mxu0 0.0
    %862 = vmatprep.subr.mxu0 0.0
    %863 = vmatpush1.xpose.msra.mxu0 0.0
    %864 = vmatprep.subr.mxu0 0.0
    %865 = vmatpush1.xpose.msra.mxu0 0.0
    %866 = vmatprep.subr.mxu0 0.0
    %867 = vmatpush1.xpose.msra.mxu0 0.0
    %868 = vmatprep.subr.mxu0 0.0
    %869 = vmatpush1.xpose.msra.mxu0 0.0
    %870 = vmatprep.subr.mxu0 0.0
    %871 = vmatpush1.xpose.msra.mxu0 0.0
    %872 = vmatprep.subr.mxu0 0.0
    %873 = vmatpush1.xpose.msra.mxu0 0.0
    %874 = vmatprep.subr.mxu0 0.0
    %875 = vmatpush1.xpose.msra.mxu0 0.0
    %876 = vmatprep.subr.mxu0 0.0
    %877 = vmatpush1.xpose.msra.mxu0 0.0
    %878 = vmatprep.subr.mxu0 0.0
    %879 = vmatpush1.xpose.msra.mxu0 0.0
    %880 = vmatprep.subr.mxu0 0.0
    %881 = vmatpush1.xpose.msra.mxu0 0.0
    %882 = vmatprep.subr.mxu0 0.0
    %883 = vmatpush1.xpose.msra.mxu0 0.0
    %884 = vmatprep.subr.mxu0 0.0
    %885 = vmatpush1.xpose.msra.mxu0 0.0
    %886 = vmatprep.subr.mxu0 0.0
    %887 = vmatpush1.xpose.msra.mxu0 0.0
    %888 = vmatprep.subr.mxu0 0.0
    %889 = vmatpush1.xpose.msra.mxu0 0.0
    %890 = vmatprep.subr.mxu0 0.0
    %891 = vmatpush1.xpose.msra.mxu0 0.0
    %892 = vmatprep.subr.mxu0 0.0
    %893 = vmatpush1.xpose.msra.mxu0 0.0
    %894 = vmatprep.subr.mxu0 0.0
    %895 = vmatpush1.xpose.msra.mxu0 0.0
    %896 = vmatprep.subr.mxu0 0.0
    %897 = vmatpush1.xpose.msra.mxu0 0.0
    %898 = vmatprep.mubr.f32.mxu0 0.0
    %899 = vmatmul.mubr.f32.gmra.mrb[0].mxu0 %v830
    %v900 = vpop.f32.mrb[0].mxu0
    %v901 = vadd.f32 0.0, %v900
    %v902 = vpop.f32.mrb[0].mxu0
    %903 = vdwg.mxu0
    %904 = vrot.lane.b32.xlu0 %v149, 112
    %v905 = vpop.permute.xlu0 %904
    %906 = vrot.lane.b32.xlu0 %v149, 80
    %v907 = vpop.permute.xlu0 %906
    %v908 = vsel %vm160, %v905, 0
    %v910 = vsel %vm160, %v907, 0
    %912 = vmatprep.subr.mxu0 0.0
    %913 = vmatpush1.xpose.msra.mxu0 %v910
    %914 = vmatprep.subr.mxu0 0.0
    %915 = vmatpush1.xpose.msra.mxu0 0.0
    %916 = vmatprep.subr.mxu0 0.0
    %917 = vmatpush1.xpose.msra.mxu0 0.0
    %918 = vmatprep.subr.mxu0 0.0
    %919 = vmatpush1.xpose.msra.mxu0 0.0
    %920 = vmatprep.subr.mxu0 0.0
    %921 = vmatpush1.xpose.msra.mxu0 0.0
    %922 = vmatprep.subr.mxu0 0.0
    %923 = vmatpush1.xpose.msra.mxu0 0.0
    %924 = vmatprep.subr.mxu0 0.0
    %925 = vmatpush1.xpose.msra.mxu0 0.0
    %926 = vmatprep.subr.mxu0 0.0
    %927 = vmatpush1.xpose.msra.mxu0 0.0
    %928 = vmatprep.subr.mxu0 0.0
    %929 = vmatpush1.xpose.msra.mxu0 0.0
    %930 = vmatprep.subr.mxu0 0.0
    %931 = vmatpush1.xpose.msra.mxu0 0.0
    %932 = vmatprep.subr.mxu0 0.0
    %933 = vmatpush1.xpose.msra.mxu0 0.0
    %934 = vmatprep.subr.mxu0 0.0
    %935 = vmatpush1.xpose.msra.mxu0 0.0
    %936 = vmatprep.subr.mxu0 0.0
    %937 = vmatpush1.xpose.msra.mxu0 0.0
    %938 = vmatprep.subr.mxu0 0.0
    %939 = vmatpush1.xpose.msra.mxu0 0.0
    %940 = vmatprep.subr.mxu0 0.0
    %941 = vmatpush1.xpose.msra.mxu0 0.0
    %942 = vmatprep.subr.mxu0 0.0
    %943 = vmatpush1.xpose.msra.mxu0 0.0
    %944 = vmatprep.subr.mxu0 0.0
    %945 = vmatpush1.xpose.msra.mxu0 0.0
    %946 = vmatprep.subr.mxu0 0.0
    %947 = vmatpush1.xpose.msra.mxu0 0.0
    %948 = vmatprep.subr.mxu0 0.0
    %949 = vmatpush1.xpose.msra.mxu0 0.0
    %950 = vmatprep.subr.mxu0 0.0
    %951 = vmatpush1.xpose.msra.mxu0 0.0
    %952 = vmatprep.subr.mxu0 0.0
    %953 = vmatpush1.xpose.msra.mxu0 0.0
    %954 = vmatprep.subr.mxu0 0.0
    %955 = vmatpush1.xpose.msra.mxu0 0.0
    %956 = vmatprep.subr.mxu0 0.0
    %957 = vmatpush1.xpose.msra.mxu0 0.0
    %958 = vmatprep.subr.mxu0 0.0
    %959 = vmatpush1.xpose.msra.mxu0 0.0
    %960 = vmatprep.subr.mxu0 0.0
    %961 = vmatpush1.xpose.msra.mxu0 0.0
    %962 = vmatprep.subr.mxu0 0.0
    %963 = vmatpush1.xpose.msra.mxu0 0.0
    %964 = vmatprep.subr.mxu0 0.0
    %965 = vmatpush1.xpose.msra.mxu0 0.0
    %966 = vmatprep.subr.mxu0 0.0
    %967 = vmatpush1.xpose.msra.mxu0 0.0
    %968 = vmatprep.subr.mxu0 0.0
    %969 = vmatpush1.xpose.msra.mxu0 0.0
    %970 = vmatprep.subr.mxu0 0.0
    %971 = vmatpush1.xpose.msra.mxu0 0.0
    %972 = vmatprep.subr.mxu0 0.0
    %973 = vmatpush1.xpose.msra.mxu0 0.0
    %974 = vmatprep.subr.mxu0 0.0
    %975 = vmatpush1.xpose.msra.mxu0 0.0
    %976 = vmatprep.mubr.f32.mxu0 0.0
    %977 = vmatmul.mubr.f32.gmra.mrb[0].mxu0 %v908
    %v978 = vpop.f32.mrb[0].mxu0
    %v979 = vadd.f32 0.0, %v978
    %v980 = vpop.f32.mrb[0].mxu0
    %981 = vdwg.mxu0
    %v982 = vmul.f32 %v901, 0.17677669
    %v983 = vmul.f32 %v979, 0.17677669
    %v984 = vsel %vm315, %v982, -inf
    %v985 = vsel %vm315, %v983, -inf
    %v986 = vsel %vm160, %v984, -inf
    %987 = vmax.xlane.f32.xlu0 %v986
    %v988 = vpop.xlane.xlu0 %987
    %v989 = vsel %vm160, %v985, -inf
    %990 = vmax.xlane.f32.xlu0 %v989
    %v991 = vpop.xlane.xlu0 %990
    %v992 = vsub.f32 %v984, %v988
    %v993 = vsub.f32 %v985, %v991
    %v994 = vmul.f32 %v992, 1.442695
    %v995 = vpow.pop %v994
    %v996 = vmul.f32 %v993, 1.442695
    %v997 = vpow.pop %v996
    %v998 = vsel %vm160, %v995, 0.0
    %999 = vadd.xlane.f32.xlu0 %v998
    %v1000 = vpop.xlane.xlu0 %999
    %v1001 = vsel %vm160, %v997, 0.0
    %1002 = vadd.xlane.f32.xlu0 %v1001
    %v1003 = vpop.xlane.xlu0 %1002
    %v1004 = vrcp.pop %v1000
    %v1005 = vrcp.pop %v1003
    %v1006 = vmul.f32 %v995, %v1004
    %v1007 = vmul.f32 %v997, %v1005
    %1008 = vrot.lane.b32.xlu0 %v146, 48
    %v1009 = vpop.permute.xlu0 %1008
    %v1012 = vsel %vm160, %v1006, 0
    %1014 = vmatprep.subr.mxu0 0.0
    %1015 = vmatpush1.msra.mxu0 %v1009
    %1016 = vmatprep.subr.mxu0 0.0
    %1017 = vmatpush1.msra.mxu0 0.0
    %1018 = vmatprep.subr.mxu0 0.0
    %1019 = vmatpush1.msra.mxu0 0.0
    %1020 = vmatprep.subr.mxu0 0.0
    %1021 = vmatpush1.msra.mxu0 0.0
    %1022 = vmatprep.subr.mxu0 0.0
    %1023 = vmatpush1.msra.mxu0 0.0
    %1024 = vmatprep.subr.mxu0 0.0
    %1025 = vmatpush1.msra.mxu0 0.0
    %1026 = vmatprep.subr.mxu0 0.0
    %1027 = vmatpush1.msra.mxu0 0.0
    %1028 = vmatprep.subr.mxu0 0.0
    %1029 = vmatpush1.msra.mxu0 0.0
    %1030 = vmatprep.subr.mxu0 0.0
    %1031 = vmatpush1.msra.mxu0 0.0
    %1032 = vmatprep.subr.mxu0 0.0
    %1033 = vmatpush1.msra.mxu0 0.0
    %1034 = vmatprep.subr.mxu0 0.0
    %1035 = vmatpush1.msra.mxu0 0.0
    %1036 = vmatprep.subr.mxu0 0.0
    %1037 = vmatpush1.msra.mxu0 0.0
    %1038 = vmatprep.subr.mxu0 0.0
    %1039 = vmatpush1.msra.mxu0 0.0
    %1040 = vmatprep.subr.mxu0 0.0
    %1041 = vmatpush1.msra.mxu0 0.0
    %1042 = vmatprep.subr.mxu0 0.0
    %1043 = vmatpush1.msra.mxu0 0.0
    %1044 = vmatprep.subr.mxu0 0.0
    %1045 = vmatpush1.msra.mxu0 0.0
    %1046 = vmatprep.subr.mxu0 0.0
    %1047 = vmatpush1.msra.mxu0 0.0
    %1048 = vmatprep.subr.mxu0 0.0
    %1049 = vmatpush1.msra.mxu0 0.0
    %1050 = vmatprep.subr.mxu0 0.0
    %1051 = vmatpush1.msra.mxu0 0.0
    %1052 = vmatprep.subr.mxu0 0.0
    %1053 = vmatpush1.msra.mxu0 0.0
    %1054 = vmatprep.subr.mxu0 0.0
    %1055 = vmatpush1.msra.mxu0 0.0
    %1056 = vmatprep.subr.mxu0 0.0
    %1057 = vmatpush1.msra.mxu0 0.0
    %1058 = vmatprep.subr.mxu0 0.0
    %1059 = vmatpush1.msra.mxu0 0.0
    %1060 = vmatprep.subr.mxu0 0.0
    %1061 = vmatpush1.msra.mxu0 0.0
    %1062 = vmatprep.subr.mxu0 0.0
    %1063 = vmatpush1.msra.mxu0 0.0
    %1064 = vmatprep.subr.mxu0 0.0
    %1065 = vmatpush1.msra.mxu0 0.0
    %1066 = vmatprep.subr.mxu0 0.0
    %1067 = vmatpush1.msra.mxu0 0.0
    %1068 = vmatprep.subr.mxu0 0.0
    %1069 = vmatpush1.msra.mxu0 0.0
    %1070 = vmatprep.subr.mxu0 0.0
    %1071 = vmatpush1.msra.mxu0 0.0
    %1072 = vmatprep.subr.mxu0 0.0
    %1073 = vmatpush1.msra.mxu0 0.0
    %1074 = vmatprep.subr.mxu0 0.0
    %1075 = vmatpush1.msra.mxu0 0.0
    %1076 = vmatprep.subr.mxu0 0.0
    %1077 = vmatpush1.msra.mxu0 0.0
    %1078 = vmatprep.mubr.f32.mxu0 0.0
    %1079 = vmatmul.mubr.f32.gmra.mrb[0].mxu0 %v1012
    %v1080 = vpop.f32.mrb[0].mxu0
    %v1081 = vadd.f32 0.0, %v1080
    %v1082 = vpop.f32.mrb[0].mxu0
    %1083 = vdwg.mxu0
    %1084 = vrot.lane.b32.xlu0 %v149, 48
    %v1085 = vpop.permute.xlu0 %1084
    %v1088 = vsel %vm160, %v1007, 0
    %1090 = vmatprep.subr.mxu0 0.0
    %1091 = vmatpush1.msra.mxu0 %v1085
    %1092 = vmatprep.subr.mxu0 0.0
    %1093 = vmatpush1.msra.mxu0 0.0
    %1094 = vmatprep.subr.mxu0 0.0
    %1095 = vmatpush1.msra.mxu0 0.0
    %1096 = vmatprep.subr.mxu0 0.0
    %1097 = vmatpush1.msra.mxu0 0.0
    %1098 = vmatprep.subr.mxu0 0.0
    %1099 = vmatpush1.msra.mxu0 0.0
    %1100 = vmatprep.subr.mxu0 0.0
    %1101 = vmatpush1.msra.mxu0 0.0
    %1102 = vmatprep.subr.mxu0 0.0
    %1103 = vmatpush1.msra.mxu0 0.0
    %1104 = vmatprep.subr.mxu0 0.0
    %1105 = vmatpush1.msra.mxu0 0.0
    %1106 = vmatprep.subr.mxu0 0.0
    %1107 = vmatpush1.msra.mxu0 0.0
    %1108 = vmatprep.subr.mxu0 0.0
    %1109 = vmatpush1.msra.mxu0 0.0
    %1110 = vmatprep.subr.mxu0 0.0
    %1111 = vmatpush1.msra.mxu0 0.0
    %1112 = vmatprep.subr.mxu0 0.0
    %1113 = vmatpush1.msra.mxu0 0.0
    %1114 = vmatprep.subr.mxu0 0.0
    %1115 = vmatpush1.msra.mxu0 0.0
    %1116 = vmatprep.subr.mxu0 0.0
    %1117 = vmatpush1.msra.mxu0 0.0
    %1118 = vmatprep.subr.mxu0 0.0
    %1119 = vmatpush1.msra.mxu0 0.0
    %1120 = vmatprep.subr.mxu0 0.0
    %1121 = vmatpush1.msra.mxu0 0.0
    %1122 = vmatprep.subr.mxu0 0.0
    %1123 = vmatpush1.msra.mxu0 0.0
    %1124 = vmatprep.subr.mxu0 0.0
    %1125 = vmatpush1.msra.mxu0 0.0
    %1126 = vmatprep.subr.mxu0 0.0
    %1127 = vmatpush1.msra.mxu0 0.0
    %1128 = vmatprep.subr.mxu0 0.0
    %1129 = vmatpush1.msra.mxu0 0.0
    %1130 = vmatprep.subr.mxu0 0.0
    %1131 = vmatpush1.msra.mxu0 0.0
    %1132 = vmatprep.subr.mxu0 0.0
    %1133 = vmatpush1.msra.mxu0 0.0
    %1134 = vmatprep.subr.mxu0 0.0
    %1135 = vmatpush1.msra.mxu0 0.0
    %1136 = vmatprep.subr.mxu0 0.0
    %1137 = vmatpush1.msra.mxu0 0.0
    %1138 = vmatprep.subr.mxu0 0.0
    %1139 = vmatpush1.msra.mxu0 0.0
    %1140 = vmatprep.subr.mxu0 0.0
    %1141 = vmatpush1.msra.mxu0 0.0
    %1142 = vmatprep.subr.mxu0 0.0
    %1143 = vmatpush1.msra.mxu0 0.0
    %1144 = vmatprep.subr.mxu0 0.0
    %1145 = vmatpush1.msra.mxu0 0.0
    %1146 = vmatprep.subr.mxu0 0.0
    %1147 = vmatpush1.msra.mxu0 0.0
    %1148 = vmatprep.subr.mxu0 0.0
    %1149 = vmatpush1.msra.mxu0 0.0
    %1150 = vmatprep.subr.mxu0 0.0
    %1151 = vmatpush1.msra.mxu0 0.0
    %1152 = vmatprep.subr.mxu0 0.0
    %1153 = vmatpush1.msra.mxu0 0.0
    %1154 = vmatprep.mubr.f32.mxu0 0.0
    %1155 = vmatmul.mubr.f32.gmra.mrb[0].mxu0 %v1088
    %v1156 = vpop.f32.mrb[0].mxu0
    %v1157 = vadd.f32 0.0, %v1156
    %v1158 = vpop.f32.mrb[0].mxu0
    %1159 = vdwg.mxu0
    %1160 = vrot.lane.b32.xlu0 %v146, 104
    %v1161 = vpop.permute.xlu0 %1160
    %1162 = vrot.lane.b32.xlu0 %v146, 72
    %v1163 = vpop.permute.xlu0 %1162
    %v1164 = vsel %vm160, %v1161, 0
    %v1166 = vsel %vm160, %v1163, 0
    %1168 = vmatprep.subr.mxu0 0.0
    %1169 = vmatpush1.xpose.msra.mxu0 %v1166
    %1170 = vmatprep.subr.mxu0 0.0
    %1171 = vmatpush1.xpose.msra.mxu0 0.0
    %1172 = vmatprep.subr.mxu0 0.0
    %1173 = vmatpush1.xpose.msra.mxu0 0.0
    %1174 = vmatprep.subr.mxu0 0.0
    %1175 = vmatpush1.xpose.msra.mxu0 0.0
    %1176 = vmatprep.subr.mxu0 0.0
    %1177 = vmatpush1.xpose.msra.mxu0 0.0
    %1178 = vmatprep.subr.mxu0 0.0
    %1179 = vmatpush1.xpose.msra.mxu0 0.0
    %1180 = vmatprep.subr.mxu0 0.0
    %1181 = vmatpush1.xpose.msra.mxu0 0.0
    %1182 = vmatprep.subr.mxu0 0.0
    %1183 = vmatpush1.xpose.msra.mxu0 0.0
    %1184 = vmatprep.subr.mxu0 0.0
    %1185 = vmatpush1.xpose.msra.mxu0 0.0
    %1186 = vmatprep.subr.mxu0 0.0
    %1187 = vmatpush1.xpose.msra.mxu0 0.0
    %1188 = vmatprep.subr.mxu0 0.0
    %1189 = vmatpush1.xpose.msra.mxu0 0.0
    %1190 = vmatprep.subr.mxu0 0.0
    %1191 = vmatpush1.xpose.msra.mxu0 0.0
    %1192 = vmatprep.subr.mxu0 0.0
    %1193 = vmatpush1.xpose.msra.mxu0 0.0
    %1194 = vmatprep.subr.mxu0 0.0
    %1195 = vmatpush1.xpose.msra.mxu0 0.0
    %1196 = vmatprep.subr.mxu0 0.0
    %1197 = vmatpush1.xpose.msra.mxu0 0.0
    %1198 = vmatprep.subr.mxu0 0.0
    %1199 = vmatpush1.xpose.msra.mxu0 0.0
    %1200 = vmatprep.subr.mxu0 0.0
    %1201 = vmatpush1.xpose.msra.mxu0 0.0
    %1202 = vmatprep.subr.mxu0 0.0
    %1203 = vmatpush1.xpose.msra.mxu0 0.0
    %1204 = vmatprep.subr.mxu0 0.0
    %1205 = vmatpush1.xpose.msra.mxu0 0.0
    %1206 = vmatprep.subr.mxu0 0.0
    %1207 = vmatpush1.xpose.msra.mxu0 0.0
    %1208 = vmatprep.subr.mxu0 0.0
    %1209 = vmatpush1.xpose.msra.mxu0 0.0
    %1210 = vmatprep.subr.mxu0 0.0
    %1211 = vmatpush1.xpose.msra.mxu0 0.0
    %1212 = vmatprep.subr.mxu0 0.0
    %1213 = vmatpush1.xpose.msra.mxu0 0.0
    %1214 = vmatprep.subr.mxu0 0.0
    %1215 = vmatpush1.xpose.msra.mxu0 0.0
    %1216 = vmatprep.subr.mxu0 0.0
    %1217 = vmatpush1.xpose.msra.mxu0 0.0
    %1218 = vmatprep.subr.mxu0 0.0
    %1219 = vmatpush1.xpose.msra.mxu0 0.0
    %1220 = vmatprep.subr.mxu0 0.0
    %1221 = vmatpush1.xpose.msra.mxu0 0.0
    %1222 = vmatprep.subr.mxu0 0.0
    %1223 = vmatpush1.xpose.msra.mxu0 0.0
    %1224 = vmatprep.subr.mxu0 0.0
    %1225 = vmatpush1.xpose.msra.mxu0 0.0
    %1226 = vmatprep.subr.mxu0 0.0
    %1227 = vmatpush1.xpose.msra.mxu0 0.0
    %1228 = vmatprep.subr.mxu0 0.0
    %1229 = vmatpush1.xpose.msra.mxu0 0.0
    %1230 = vmatprep.subr.mxu0 0.0
    %1231 = vmatpush1.xpose.msra.mxu0 0.0
    %1232 = vmatprep.mubr.f32.mxu0 0.0
    %1233 = vmatmul.mubr.f32.gmra.mrb[0].mxu0 %v1164
    %v1234 = vpop.f32.mrb[0].mxu0
    %v1235 = vadd.f32 0.0, %v1234
    %v1236 = vpop.f32.mrb[0].mxu0
    %1237 = vdwg.mxu0
    %1238 = vrot.lane.b32.xlu0 %v149, 104
    %v1239 = vpop.permute.xlu0 %1238
    %1240 = vrot.lane.b32.xlu0 %v149, 72
    %v1241 = vpop.permute.xlu0 %1240
    %v1242 = vsel %vm160, %v1239, 0
    %v1244 = vsel %vm160, %v1241, 0
    %1246 = vmatprep.subr.mxu0 0.0
    %1247 = vmatpush1.xpose.msra.mxu0 %v1244
    %1248 = vmatprep.subr.mxu0 0.0
    %1249 = vmatpush1.xpose.msra.mxu0 0.0
    %1250 = vmatprep.subr.mxu0 0.0
    %1251 = vmatpush1.xpose.msra.mxu0 0.0
    %1252 = vmatprep.subr.mxu0 0.0
    %1253 = vmatpush1.xpose.msra.mxu0 0.0
    %1254 = vmatprep.subr.mxu0 0.0
    %1255 = vmatpush1.xpose.msra.mxu0 0.0
    %1256 = vmatprep.subr.mxu0 0.0
    %1257 = vmatpush1.xpose.msra.mxu0 0.0
    %1258 = vmatprep.subr.mxu0 0.0
    %1259 = vmatpush1.xpose.msra.mxu0 0.0
    %1260 = vmatprep.subr.mxu0 0.0
    %1261 = vmatpush1.xpose.msra.mxu0 0.0
    %1262 = vmatprep.subr.mxu0 0.0
    %1263 = vmatpush1.xpose.msra.mxu0 0.0
    %1264 = vmatprep.subr.mxu0 0.0
    %1265 = vmatpush1.xpose.msra.mxu0 0.0
    %1266 = vmatprep.subr.mxu0 0.0
    %1267 = vmatpush1.xpose.msra.mxu0 0.0
    %1268 = vmatprep.subr.mxu0 0.0
    %1269 = vmatpush1.xpose.msra.mxu0 0.0
    %1270 = vmatprep.subr.mxu0 0.0
    %1271 = vmatpush1.xpose.msra.mxu0 0.0
    %1272 = vmatprep.subr.mxu0 0.0
    %1273 = vmatpush1.xpose.msra.mxu0 0.0
    %1274 = vmatprep.subr.mxu0 0.0
    %1275 = vmatpush1.xpose.msra.mxu0 0.0
    %1276 = vmatprep.subr.mxu0 0.0
    %1277 = vmatpush1.xpose.msra.mxu0 0.0
    %1278 = vmatprep.subr.mxu0 0.0
    %1279 = vmatpush1.xpose.msra.mxu0 0.0
    %1280 = vmatprep.subr.mxu0 0.0
    %1281 = vmatpush1.xpose.msra.mxu0 0.0
    %1282 = vmatprep.subr.mxu0 0.0
    %1283 = vmatpush1.xpose.msra.mxu0 0.0
    %1284 = vmatprep.subr.mxu0 0.0
    %1285 = vmatpush1.xpose.msra.mxu0 0.0
    %1286 = vmatprep.subr.mxu0 0.0
    %1287 = vmatpush1.xpose.msra.mxu0 0.0
    %1288 = vmatprep.subr.mxu0 0.0
    %1289 = vmatpush1.xpose.msra.mxu0 0.0
    %1290 = vmatprep.subr.mxu0 0.0
    %1291 = vmatpush1.xpose.msra.mxu0 0.0
    %1292 = vmatprep.subr.mxu0 0.0
    %1293 = vmatpush1.xpose.msra.mxu0 0.0
    %1294 = vmatprep.subr.mxu0 0.0
    %1295 = vmatpush1.xpose.msra.mxu0 0.0
    %1296 = vmatprep.subr.mxu0 0.0
    %1297 = vmatpush1.xpose.msra.mxu0 0.0
    %1298 = vmatprep.subr.mxu0 0.0
    %1299 = vmatpush1.xpose.msra.mxu0 0.0
    %1300 = vmatprep.subr.mxu0 0.0
    %1301 = vmatpush1.xpose.msra.mxu0 0.0
    %1302 = vmatprep.subr.mxu0 0.0
    %1303 = vmatpush1.xpose.msra.mxu0 0.0
    %1304 = vmatprep.subr.mxu0 0.0
    %1305 = vmatpush1.xpose.msra.mxu0 0.0
    %1306 = vmatprep.subr.mxu0 0.0
    %1307 = vmatpush1.xpose.msra.mxu0 0.0
    %1308 = vmatprep.subr.mxu0 0.0
    %1309 = vmatpush1.xpose.msra.mxu0 0.0
    %1310 = vmatprep.mubr.f32.mxu0 0.0
    %1311 = vmatmul.mubr.f32.gmra.mrb[0].mxu0 %v1242
    %v1312 = vpop.f32.mrb[0].mxu0
    %v1313 = vadd.f32 0.0, %v1312
    %v1314 = vpop.f32.mrb[0].mxu0
    %1315 = vdwg.mxu0
    %v1316 = vmul.f32 %v1235, 0.17677669
    %v1317 = vmul.f32 %v1313, 0.17677669
    %v1318 = vsel %vm315, %v1316, -inf
    %v1319 = vsel %vm315, %v1317, -inf
    %v1320 = vsel %vm160, %v1318, -inf
    %1321 = vmax.xlane.f32.xlu0 %v1320
    %v1322 = vpop.xlane.xlu0 %1321
    %v1323 = vsel %vm160, %v1319, -inf
    %1324 = vmax.xlane.f32.xlu0 %v1323
    %v1325 = vpop.xlane.xlu0 %1324
    %v1326 = vsub.f32 %v1318, %v1322
    %v1327 = vsub.f32 %v1319, %v1325
    %v1328 = vmul.f32 %v1326, 1.442695
    %v1329 = vpow.pop %v1328
    %v1330 = vmul.f32 %v1327, 1.442695
    %v1331 = vpow.pop %v1330
    %v1332 = vsel %vm160, %v1329, 0.0
    %1333 = vadd.xlane.f32.xlu0 %v1332
    %v1334 = vpop.xlane.xlu0 %1333
    %v1335 = vsel %vm160, %v1331, 0.0
    %1336 = vadd.xlane.f32.xlu0 %v1335
    %v1337 = vpop.xlane.xlu0 %1336
    %v1338 = vrcp.pop %v1334
    %v1339 = vrcp.pop %v1337
    %v1340 = vmul.f32 %v1329, %v1338
    %v1341 = vmul.f32 %v1331, %v1339
    %1342 = vrot.lane.b32.xlu0 %v146, 40
    %v1343 = vpop.permute.xlu0 %1342
    %v1346 = vsel %vm160, %v1340, 0
    %1348 = vmatprep.subr.mxu0 0.0
    %1349 = vmatpush1.msra.mxu0 %v1343
    %1350 = vmatprep.subr.mxu0 0.0
    %1351 = vmatpush1.msra.mxu0 0.0
    %1352 = vmatprep.subr.mxu0 0.0
    %1353 = vmatpush1.msra.mxu0 0.0
    %1354 = vmatprep.subr.mxu0 0.0
    %1355 = vmatpush1.msra.mxu0 0.0
    %1356 = vmatprep.subr.mxu0 0.0
    %1357 = vmatpush1.msra.mxu0 0.0
    %1358 = vmatprep.subr.mxu0 0.0
    %1359 = vmatpush1.msra.mxu0 0.0
    %1360 = vmatprep.subr.mxu0 0.0
    %1361 = vmatpush1.msra.mxu0 0.0
    %1362 = vmatprep.subr.mxu0 0.0
    %1363 = vmatpush1.msra.mxu0 0.0
    %1364 = vmatprep.subr.mxu0 0.0
    %1365 = vmatpush1.msra.mxu0 0.0
    %1366 = vmatprep.subr.mxu0 0.0
    %1367 = vmatpush1.msra.mxu0 0.0
    %1368 = vmatprep.subr.mxu0 0.0
    %1369 = vmatpush1.msra.mxu0 0.0
    %1370 = vmatprep.subr.mxu0 0.0
    %1371 = vmatpush1.msra.mxu0 0.0
    %1372 = vmatprep.subr.mxu0 0.0
    %1373 = vmatpush1.msra.mxu0 0.0
    %1374 = vmatprep.subr.mxu0 0.0
    %1375 = vmatpush1.msra.mxu0 0.0
    %1376 = vmatprep.subr.mxu0 0.0
    %1377 = vmatpush1.msra.mxu0 0.0
    %1378 = vmatprep.subr.mxu0 0.0
    %1379 = vmatpush1.msra.mxu0 0.0
    %1380 = vmatprep.subr.mxu0 0.0
    %1381 = vmatpush1.msra.mxu0 0.0
    %1382 = vmatprep.subr.mxu0 0.0
    %1383 = vmatpush1.msra.mxu0 0.0
    %1384 = vmatprep.subr.mxu0 0.0
    %1385 = vmatpush1.msra.mxu0 0.0
    %1386 = vmatprep.subr.mxu0 0.0
    %1387 = vmatpush1.msra.mxu0 0.0
    %1388 = vmatprep.subr.mxu0 0.0
    %1389 = vmatpush1.msra.mxu0 0.0
    %1390 = vmatprep.subr.mxu0 0.0
    %1391 = vmatpush1.msra.mxu0 0.0
    %1392 = vmatprep.subr.mxu0 0.0
    %1393 = vmatpush1.msra.mxu0 0.0
    %1394 = vmatprep.subr.mxu0 0.0
    %1395 = vmatpush1.msra.mxu0 0.0
    %1396 = vmatprep.subr.mxu0 0.0
    %1397 = vmatpush1.msra.mxu0 0.0
    %1398 = vmatprep.subr.mxu0 0.0
    %1399 = vmatpush1.msra.mxu0 0.0
    %1400 = vmatprep.subr.mxu0 0.0
    %1401 = vmatpush1.msra.mxu0 0.0
    %1402 = vmatprep.subr.mxu0 0.0
    %1403 = vmatpush1.msra.mxu0 0.0
    %1404 = vmatprep.subr.mxu0 0.0
    %1405 = vmatpush1.msra.mxu0 0.0
    %1406 = vmatprep.subr.mxu0 0.0
    %1407 = vmatpush1.msra.mxu0 0.0
    %1408 = vmatprep.subr.mxu0 0.0
    %1409 = vmatpush1.msra.mxu0 0.0
    %1410 = vmatprep.subr.mxu0 0.0
    %1411 = vmatpush1.msra.mxu0 0.0
    %1412 = vmatprep.mubr.f32.mxu0 0.0
    %1413 = vmatmul.mubr.f32.gmra.mrb[0].mxu0 %v1346
    %v1414 = vpop.f32.mrb[0].mxu0
    %v1415 = vadd.f32 0.0, %v1414
    %v1416 = vpop.f32.mrb[0].mxu0
    %1417 = vdwg.mxu0
    %1418 = vrot.lane.b32.xlu0 %v149, 40
    %v1419 = vpop.permute.xlu0 %1418
    %v1422 = vsel %vm160, %v1341, 0
    %1424 = vmatprep.subr.mxu0 0.0
    %1425 = vmatpush1.msra.mxu0 %v1419
    %1426 = vmatprep.subr.mxu0 0.0
    %1427 = vmatpush1.msra.mxu0 0.0
    %1428 = vmatprep.subr.mxu0 0.0
    %1429 = vmatpush1.msra.mxu0 0.0
    %1430 = vmatprep.subr.mxu0 0.0
    %1431 = vmatpush1.msra.mxu0 0.0
    %1432 = vmatprep.subr.mxu0 0.0
    %1433 = vmatpush1.msra.mxu0 0.0
    %1434 = vmatprep.subr.mxu0 0.0
    %1435 = vmatpush1.msra.mxu0 0.0
    %1436 = vmatprep.subr.mxu0 0.0
    %1437 = vmatpush1.msra.mxu0 0.0
    %1438 = vmatprep.subr.mxu0 0.0
    %1439 = vmatpush1.msra.mxu0 0.0
    %1440 = vmatprep.subr.mxu0 0.0
    %1441 = vmatpush1.msra.mxu0 0.0
    %1442 = vmatprep.subr.mxu0 0.0
    %1443 = vmatpush1.msra.mxu0 0.0
    %1444 = vmatprep.subr.mxu0 0.0
    %1445 = vmatpush1.msra.mxu0 0.0
    %1446 = vmatprep.subr.mxu0 0.0
    %1447 = vmatpush1.msra.mxu0 0.0
    %1448 = vmatprep.subr.mxu0 0.0
    %1449 = vmatpush1.msra.mxu0 0.0
    %1450 = vmatprep.subr.mxu0 0.0
    %1451 = vmatpush1.msra.mxu0 0.0
    %1452 = vmatprep.subr.mxu0 0.0
    %1453 = vmatpush1.msra.mxu0 0.0
    %1454 = vmatprep.subr.mxu0 0.0
    %1455 = vmatpush1.msra.mxu0 0.0
    %1456 = vmatprep.subr.mxu0 0.0
    %1457 = vmatpush1.msra.mxu0 0.0
    %1458 = vmatprep.subr.mxu0 0.0
    %1459 = vmatpush1.msra.mxu0 0.0
    %1460 = vmatprep.subr.mxu0 0.0
    %1461 = vmatpush1.msra.mxu0 0.0
    %1462 = vmatprep.subr.mxu0 0.0
    %1463 = vmatpush1.msra.mxu0 0.0
    %1464 = vmatprep.subr.mxu0 0.0
    %1465 = vmatpush1.msra.mxu0 0.0
    %1466 = vmatprep.subr.mxu0 0.0
    %1467 = vmatpush1.msra.mxu0 0.0
    %1468 = vmatprep.subr.mxu0 0.0
    %1469 = vmatpush1.msra.mxu0 0.0
    %1470 = vmatprep.subr.mxu0 0.0
    %1471 = vmatpush1.msra.mxu0 0.0
    %1472 = vmatprep.subr.mxu0 0.0
    %1473 = vmatpush1.msra.mxu0 0.0
    %1474 = vmatprep.subr.mxu0 0.0
    %1475 = vmatpush1.msra.mxu0 0.0
    %1476 = vmatprep.subr.mxu0 0.0
    %1477 = vmatpush1.msra.mxu0 0.0
    %1478 = vmatprep.subr.mxu0 0.0
    %1479 = vmatpush1.msra.mxu0 0.0
    %1480 = vmatprep.subr.mxu0 0.0
    %1481 = vmatpush1.msra.mxu0 0.0
    %1482 = vmatprep.subr.mxu0 0.0
    %1483 = vmatpush1.msra.mxu0 0.0
    %1484 = vmatprep.subr.mxu0 0.0
    %1485 = vmatpush1.msra.mxu0 0.0
    %1486 = vmatprep.subr.mxu0 0.0
    %1487 = vmatpush1.msra.mxu0 0.0
    %1488 = vmatprep.mubr.f32.mxu0 0.0
    %1489 = vmatmul.mubr.f32.gmra.mrb[0].mxu0 %v1422
    %v1490 = vpop.f32.mrb[0].mxu0
    %v1491 = vadd.f32 0.0, %v1490
    %v1492 = vpop.f32.mrb[0].mxu0
    %1493 = vdwg.mxu0
    %1496 = vrot.lane.b32.xlu0 %v747, 8
    %v1497 = vpop.permute.xlu0 %1496
    %1498 = vrot.lane.b32.xlu0 %v823, 8
    %v1499 = vpop.permute.xlu0 %1498
    %1504 = vrot.lane.b32.xlu0 %v1081, 16
    %v1505 = vpop.permute.xlu0 %1504
    %1506 = vrot.lane.b32.xlu0 %v1157, 16
    %v1507 = vpop.permute.xlu0 %1506
    %1512 = vrot.lane.b32.xlu0 %v1415, 24
    %v1513 = vpop.permute.xlu0 %1512
    %1514 = vrot.lane.b32.xlu0 %v1491, 24
    %v1515 = vpop.permute.xlu0 %1514
    %v1518 = vsel %vm160, %v413, %v1497
    %v1519 = vsel %vm160, %v489, %v1499
    %vm1520 = vcmask 130048
    %v1521 = vsel %vm1520, %v1518, %v1505
    %v1522 = vsel %vm1520, %v1519, %v1507
    %vm1523 = vcmask 195584
    %v1524 = vsel %vm1523, %v1521, %v1513
    %v1525 = vsel %vm1523, %v1522, %v1515
    %v1526 = vpack.c.bf16 %v1525, %v1524
    %v1527 = vld [vmem:[%s4] sm:$0xf]
    %v1528 = vld [vmem:[%s4 + $0x4] sm:$0xf]
    %v1529 = vld [vmem:[%s4 + $0x8] sm:$0xf]
    %v1530 = vld [vmem:[%s4 + $0xc] sm:$0xf]
    %v1531 = vld [vmem:[%s5] sm:$0x1]
    %v1533 = vlaneseq
    %v1534 = vshrl.u32 %v1533, 7
    %v1535 = vsub.s32 0, %v1534
    %v1536 = vrot.slane %v1531, %v1535
    %v1542 = vunpack.c.l.b16 %v1527
    %v1543 = vunpack.c.l.b16 %v1528
    %v1544 = vunpack.c.l.b16 %v1529
    %v1545 = vunpack.c.l.b16 %v1530
    %v1546 = vpack.c.b16 %v1543, %v1542
    %v1547 = vpack.c.b16 %v1545, %v1544
    %v1551 = vsel %vm47, %v1526, 0
    %1553 = vmatprep.subr.bf16.mxu0 0
    %1554 = vmatpush1.bf16.msra.mxu0 %v1546
    %1555 = vmatprep.subr.bf16.mxu0 0
    %1556 = vmatpush1.bf16.msra.mxu0 %v1547
    %1557 = vmatprep.subr.bf16.mxu0 0
    %1558 = vmatpush1.bf16.msra.mxu0 0
    %1559 = vmatprep.subr.bf16.mxu0 0
    %1560 = vmatpush1.bf16.msra.mxu0 0
    %1561 = vmatprep.subr.bf16.mxu0 0
    %1562 = vmatpush1.bf16.msra.mxu0 0
    %1563 = vmatprep.subr.bf16.mxu0 0
    %1564 = vmatpush1.bf16.msra.mxu0 0
    %1565 = vmatprep.subr.bf16.mxu0 0
    %1566 = vmatpush1.bf16.msra.mxu0 0
    %1567 = vmatprep.subr.bf16.mxu0 0
    %1568 = vmatpush1.bf16.msra.mxu0 0
    %1569 = vmatprep.subr.bf16.mxu0 0
    %1570 = vmatpush1.bf16.msra.mxu0 0
    %1571 = vmatprep.subr.bf16.mxu0 0
    %1572 = vmatpush1.bf16.msra.mxu0 0
    %1573 = vmatprep.subr.bf16.mxu0 0
    %1574 = vmatpush1.bf16.msra.mxu0 0
    %1575 = vmatprep.subr.bf16.mxu0 0
    %1576 = vmatpush1.bf16.msra.mxu0 0
    %1577 = vmatprep.subr.bf16.mxu0 0
    %1578 = vmatpush1.bf16.msra.mxu0 0
    %1579 = vmatprep.subr.bf16.mxu0 0
    %1580 = vmatpush1.bf16.msra.mxu0 0
    %1581 = vmatprep.subr.bf16.mxu0 0
    %1582 = vmatpush1.bf16.msra.mxu0 0
    %1583 = vmatprep.subr.bf16.mxu0 0
    %1584 = vmatpush1.bf16.msra.mxu0 0
    %1585 = vmatprep.mubr.bf16.mxu0 0
    %1586 = vmatmul.mubr.bf16.gmra.mrb[0].mxu0 %v1551
    %v1587 = vpop.f32.mrb[0].mxu0
    %v1588 = vadd.f32 %v1536, %v1587
    %v1589 = vpop.f32.mrb[0].mxu0
    %v1590 = vpop.f32.mrb[0].mxu0
    %v1591 = vadd.f32 %v1536, %v1590
    %v1592 = vpop.f32.mrb[0].mxu0
    %1593 = vdwg.mxu0
    %v1594 = vadd.f32 %v43, %v1588
    %v1595 = vadd.f32 %v44, %v1591
    %v1596 = vld [vmem:[%s6] sm:$0x1]
    %v1597 = vld [vmem:[%s7] sm:$0x1]
    %v1598 = vsel %vm47, %v1594, 0.0
    %1599 = vadd.xlane.f32.xlu0 %v1598
    %v1600 = vpop.xlane.xlu0 %1599
    %v1601 = vsel %vm47, %v1595, 0.0
    %1602 = vadd.xlane.f32.xlu0 %v1601
    %v1603 = vpop.xlane.xlu0 %1602
    %v1604 = vmul.f32 %v1600, %v54
    %v1605 = vmul.f32 %v1603, %v54
    %v1606 = vsub.f32 %v1594, %v1604
    %v1607 = vsub.f32 %v1595, %v1605
    %v1608 = vmul.f32 %v1606, %v1606
    %v1609 = vmul.f32 %v1607, %v1607
    %v1610 = vsel %vm47, %v1608, 0.0
    %1611 = vadd.xlane.f32.xlu0 %v1610
    %v1612 = vpop.xlane.xlu0 %1611
    %v1613 = vsel %vm47, %v1609, 0.0
    %1614 = vadd.xlane.f32.xlu0 %v1613
    %v1615 = vpop.xlane.xlu0 %1614
    %v1616 = vmul.f32 %v1612, %v54
    %v1617 = vmul.f32 %v1615, %v54
    %v1618 = vadd.f32 %v1616, 1e-05
    %v1619 = vadd.f32 %v1617, 1e-05
    %v1620 = vrsqrt.pop %v1618
    %v1621 = vrsqrt.pop %v1619
    %v1622 = vmul.f32 %v1606, %v1620
    %v1623 = vmul.f32 %v1607, %v1621
    %v1625 = vlaneseq
    %v1626 = vshrl.u32 %v1625, 7
    %v1627 = vsub.s32 0, %v1626
    %v1628 = vrot.slane %v1596, %v1627
    %v1630 = vmul.f32 %v1622, %v1628
    %v1631 = vmul.f32 %v1623, %v1628
    %v1633 = vlaneseq
    %v1634 = vshrl.u32 %v1633, 7
    %v1635 = vsub.s32 0, %v1634
    %v1636 = vrot.slane %v1597, %v1635
    %v1638 = vadd.f32 %v1630, %v1636
    %v1639 = vadd.f32 %v1631, %v1636
    %v1640 = vpack.c.bf16 %v1639, %v1638
    %v1641 = vld [vmem:[%s8] sm:$0xf]
    %v1642 = vld [vmem:[%s8 + $0x4] sm:$0xf]
    %v1643 = vld [vmem:[%s8 + $0x8] sm:$0xf]
    %v1644 = vld [vmem:[%s8 + $0xc] sm:$0xf]
    %v1645 = vld [vmem:[%s9] sm:$0x1]
    %v1647 = vlaneseq
    %v1648 = vshrl.u32 %v1647, 7
    %v1649 = vsub.s32 0, %v1648
    %v1650 = vrot.slane %v1645, %v1649
    %v1656 = vunpack.c.l.b16 %v1641
    %v1657 = vunpack.c.l.b16 %v1642
    %v1658 = vunpack.c.l.b16 %v1643
    %v1659 = vunpack.c.l.b16 %v1644
    %v1660 = vpack.c.b16 %v1657, %v1656
    %v1661 = vpack.c.b16 %v1659, %v1658
    %v1665 = vsel %vm47, %v1640, 0
    %1667 = vmatprep.subr.bf16.mxu0 0
    %1668 = vmatpush1.bf16.msra.mxu0 %v1660
    %1669 = vmatprep.subr.bf16.mxu0 0
    %1670 = vmatpush1.bf16.msra.mxu0 %v1661
    %1671 = vmatprep.subr.bf16.mxu0 0
    %1672 = vmatpush1.bf16.msra.mxu0 0
    %1673 = vmatprep.subr.bf16.mxu0 0
    %1674 = vmatpush1.bf16.msra.mxu0 0
    %1675 = vmatprep.subr.bf16.mxu0 0
    %1676 = vmatpush1.bf16.msra.mxu0 0
    %1677 = vmatprep.subr.bf16.mxu0 0
    %1678 = vmatpush1.bf16.msra.mxu0 0
    %1679 = vmatprep.subr.bf16.mxu0 0
    %1680 = vmatpush1.bf16.msra.mxu0 0
    %1681 = vmatprep.subr.bf16.mxu0 0
    %1682 = vmatpush1.bf16.msra.mxu0 0
    %1683 = vmatprep.subr.bf16.mxu0 0
    %1684 = vmatpush1.bf16.msra.mxu0 0
    %1685 = vmatprep.subr.bf16.mxu0 0
    %1686 = vmatpush1.bf16.msra.mxu0 0
    %1687 = vmatprep.subr.bf16.mxu0 0
    %1688 = vmatpush1.bf16.msra.mxu0 0
    %1689 = vmatprep.subr.bf16.mxu0 0
    %1690 = vmatpush1.bf16.msra.mxu0 0
    %1691 = vmatprep.subr.bf16.mxu0 0
    %1692 = vmatpush1.bf16.msra.mxu0 0
    %1693 = vmatprep.subr.bf16.mxu0 0
    %1694 = vmatpush1.bf16.msra.mxu0 0
    %1695 = vmatprep.subr.bf16.mxu0 0
    %1696 = vmatpush1.bf16.msra.mxu0 0
    %1697 = vmatprep.subr.bf16.mxu0 0
    %1698 = vmatpush1.bf16.msra.mxu0 0
    %1699 = vmatprep.mubr.bf16.mxu0 0
    %1700 = vmatmul.mubr.bf16.gmra.mrb[0].mxu0 %v1665
    %v1701 = vpop.f32.mrb[0].mxu0
    %v1702 = vadd.f32 %v1650, %v1701
    %v1703 = vpop.f32.mrb[0].mxu0
    %v1704 = vpop.f32.mrb[0].mxu0
    %v1705 = vadd.f32 %v1650, %v1704
    %v1706 = vpop.f32.mrb[0].mxu0
    %1707 = vdwg.mxu0
    %v1708 = vmax.f32 %v1702, 0.0
    %v1709 = vmax.f32 %v1705, 0.0
    %v1710 = vpack.c.bf16 %v1709, %v1708
    %v1711 = vld [vmem:[%s10] sm:$0xf]
    %v1712 = vld [vmem:[%s10 + $0x4] sm:$0xf]
    %v1713 = vld [vmem:[%s10 + $0x8] sm:$0xf]
    %v1714 = vld [vmem:[%s10 + $0xc] sm:$0xf]
    %v1715 = vld [vmem:[%s10 + $0x10] sm:$0xf]
    %v1716 = vld [vmem:[%s10 + $0x14] sm:$0xf]
    %v1717 = vld [vmem:[%s10 + $0x18] sm:$0xf]
    %v1718 = vld [vmem:[%s10 + $0x1c] sm:$0xf]
    %v1719 = vld [vmem:[%s10 + $0x20] sm:$0xf]
    %v1720 = vld [vmem:[%s10 + $0x24] sm:$0xf]
    %v1721 = vld [vmem:[%s10 + $0x28] sm:$0xf]
    %v1722 = vld [vmem:[%s10 + $0x2c] sm:$0xf]
    %v1723 = vld [vmem:[%s10 + $0x30] sm:$0xf]
    %v1724 = vld [vmem:[%s10 + $0x34] sm:$0xf]
    %v1725 = vld [vmem:[%s10 + $0x38] sm:$0xf]
    %v1726 = vld [vmem:[%s10 + $0x3c] sm:$0xf]
    %v1727 = vld [vmem:[%s11] sm:$0x1]
    %v1729 = vlaneseq
    %v1730 = vshrl.u32 %v1729, 7
    %v1731 = vsub.s32 0, %v1730
    %v1732 = vrot.slane %v1727, %v1731
    %v1750 = vunpack.c.l.b16 %v1711
    %v1751 = vunpack.c.l.b16 %v1712
    %v1752 = vunpack.c.l.b16 %v1713
    %v1753 = vunpack.c.l.b16 %v1714
    %v1754 = vunpack.c.l.b16 %v1715
    %v1755 = vunpack.c.l.b16 %v1716
    %v1756 = vunpack.c.l.b16 %v1717
    %v1757 = vunpack.c.l.b16 %v1718
    %v1758 = vunpack.c.l.b16 %v1719
    %v1759 = vunpack.c.l.b16 %v1720
    %v1760 = vunpack.c.l.b16 %v1721
    %v1761 = vunpack.c.l.b16 %v1722
    %v1762 = vunpack.c.l.b16 %v1723
    %v1763 = vunpack.c.l.b16 %v1724
    %v1764 = vunpack.c.l.b16 %v1725
    %v1765 = vunpack.c.l.b16 %v1726
    %v1766 = vpack.c.b16 %v1751, %v1750
    %v1767 = vpack.c.b16 %v1753, %v1752
    %v1768 = vpack.c.b16 %v1755, %v1754
    %v1769 = vpack.c.b16 %v1757, %v1756
    %v1770 = vpack.c.b16 %v1759, %v1758
    %v1771 = vpack.c.b16 %v1761, %v1760
    %v1772 = vpack.c.b16 %v1763, %v1762
    %v1773 = vpack.c.b16 %v1765, %v1764
    %1782 = vmatprep.subr.bf16.mxu0 0
    %1783 = vmatpush1.bf16.msra.mxu0 %v1766
    %1784 = vmatprep.subr.bf16.mxu0 0
    %1785 = vmatpush1.bf16.msra.mxu0 %v1767
    %1786 = vmatprep.subr.bf16.mxu0 0
    %1787 = vmatpush1.bf16.msra.mxu0 %v1768
    %1788 = vmatprep.subr.bf16.mxu0 0
    %1789 = vmatpush1.bf16.msra.mxu0 %v1769
    %1790 = vmatprep.subr.bf16.mxu0 0
    %1791 = vmatpush1.bf16.msra.mxu0 %v1770
    %1792 = vmatprep.subr.bf16.mxu0 0
    %1793 = vmatpush1.bf16.msra.mxu0 %v1771
    %1794 = vmatprep.subr.bf16.mxu0 0
    %1795 = vmatpush1.bf16.msra.mxu0 %v1772
    %1796 = vmatprep.subr.bf16.mxu0 0
    %1797 = vmatpush1.bf16.msra.mxu0 %v1773
    %1798 = vmatprep.subr.bf16.mxu0 0
    %1799 = vmatpush1.bf16.msra.mxu0 0
    %1800 = vmatprep.subr.bf16.mxu0 0
    %1801 = vmatpush1.bf16.msra.mxu0 0
    %1802 = vmatprep.subr.bf16.mxu0 0
    %1803 = vmatpush1.bf16.msra.mxu0 0
    %1804 = vmatprep.subr.bf16.mxu0 0
    %1805 = vmatpush1.bf16.msra.mxu0 0
    %1806 = vmatprep.subr.bf16.mxu0 0
    %1807 = vmatpush1.bf16.msra.mxu0 0
    %1808 = vmatprep.subr.bf16.mxu0 0
    %1809 = vmatpush1.bf16.msra.mxu0 0
    %1810 = vmatprep.subr.bf16.mxu0 0
    %1811 = vmatpush1.bf16.msra.mxu0 0
    %1812 = vmatprep.subr.bf16.mxu0 0
    %1813 = vmatpush1.bf16.msra.mxu0 0
    %1814 = vmatprep.mubr.bf16.mxu0 0
    %1815 = vmatmul.mubr.bf16.gmra.mrb[0].mxu0 %v1710
    %v1816 = vpop.f32.mrb[0].mxu0
    %v1817 = vadd.f32 %v1732, %v1816
    %v1818 = vpop.f32.mrb[0].mxu0
    %v1819 = vpop.f32.mrb[0].mxu0
    %v1820 = vadd.f32 %v1732, %v1819
    %v1821 = vpop.f32.mrb[0].mxu0
    %1822 = vdwg.mxu0
    %v1823 = vadd.f32 %v1594, %v1817
    %v1824 = vadd.f32 %v1595, %v1820
    %1825 = vst.msk [vmem:[#allocation2] sm:$0xff] %vm47, %v1823
    %1826 = vst.msk [vmem:[#allocation2 + $0x8] sm:$0xff] %vm47, %v1824
    // Predicated region
    $region50: #{tpu_custom_call.1} parent=1 // pred_check
      _
    $region51: #{tpu_custom_call.1} parent=1 // pred_check_branch
      %1828 = sbr.rel (0) target = $region53
    $region52: #{tpu_custom_call.1} parent=1 // pred_region
      %s1830 = ssub.s32 256, 256
      %1831 = vsyncadd [#allocation3], %s1830
      %s1832 = sshll.u32 [#allocation2], 4
      %s1833 = int_to_ptr.vmem [resolvable:$true] %s1832
      %1838 = dma.vmem_to_hbm [thread:$0]  %s1833, 256, %s12, [#allocation3], 128, 128, 8
    $region53: #{tpu_custom_call.1} parent=1 // pred_fallthru
      _
    // Predicated region
    $region54: #{tpu_custom_call.1} parent=1 // pred_check
      _
    $region55: #{tpu_custom_call.1} parent=1 // pred_check_branch
      %1840 = sbr.rel (0) target = $region57
    $region56: #{tpu_custom_call.1} parent=1 // pred_region
      %1841 = dma.done [#allocation3], 256
    $region57: #{tpu_custom_call.1} parent=1 // pred_fallthru
      _
    %1842 = vsyncpa [#allocation3], 1

</llo_original>
